<compile_context>
chip_gen: v5e
topology: v5e:2x2
jax: 0.10.0
libtpu: 0.0.40
codegen_flags: <defaults>
</compile_context>

<pallas_src>
import jax
import jax.numpy as jnp
from jax.experimental import pallas as pl
from jax.experimental.pallas import tpu as pltpu


_VMEM_LIMIT_BYTES = 48 * 1024 * 1024  # fits v7x's 64 MiB VMEM with headroom


def _pick_tile(n, cap, quantum):
    """Largest tile <= cap that divides n and is a multiple of `quantum`.

    Falls back to the full dimension (always a legal block size)."""
    if n <= cap:
        return n
    t = (cap // quantum) * quantum
    while t >= quantum:
        if n % t == 0:
            return t
        t -= quantum
    return n


# ----------------------------------------------------------------------------
# model1: 2-layer GCN, fused into ONE kernel.
#   pass 0:  q    = relu(A_hat @ (X W1) + b1) @ W2      (q kept in VMEM)
#   pass 1:  post = A_hat @ q + b2
# A_hat is built per block as A_raw * dinv_i * dinv_j (never materialized).
# ----------------------------------------------------------------------------
def _gcn_fused_kernel(a_ref, dinv_c_ref, dinv_r_ref, xw1_ref, b1_ref, w2_ref,
                      b2_ref, post_ref, acc1_ref, acc2_ref, q_ref):
    p = pl.program_id(0)
    i = pl.program_id(1)
    k = pl.program_id(2)
    last_k = pl.num_programs(2) - 1
    tm = acc1_ref.shape[0]
    tk = a_ref.shape[1]

    # normalized adjacency block built on the fly (VPU filler under the DMA)
    a_blk = a_ref[...] * dinv_c_ref[...] * dinv_r_ref[...]

    # ---------------- pass 0: layer 1, q kept resident in VMEM --------------
    @pl.when(jnp.logical_and(p == 0, k == 0))
    def _init1():
        acc1_ref[...] = jnp.zeros_like(acc1_ref)

    @pl.when(p == 0)
    def _acc1():
        acc1_ref[...] += jnp.dot(a_blk, xw1_ref[...],
                                 preferred_element_type=jnp.float32)

    @pl.when(jnp.logical_and(p == 0, k == last_k))
    def _fin1():
        h = jnp.maximum(acc1_ref[...] + b1_ref[...], 0.0)        # relu
        row0 = i * tm
        if tm % 8 == 0:
            row0 = pl.multiple_of(row0, 8)
        q_ref[pl.ds(row0, tm), :] = jnp.dot(
            h, w2_ref[...], preferred_element_type=jnp.float32)
        # deterministic pass-0 writeback (overwritten with the real result in
        # pass 1); costs one tiny store.
        post_ref[...] = jnp.zeros_like(post_ref)

    # ---------------- pass 1: layer 2 ---------------------------------------
    @pl.when(jnp.logical_and(p == 1, k == 0))
    def _init2():
        acc2_ref[...] = jnp.zeros_like(acc2_ref)

    @pl.when(p == 1)
    def _acc2():
        col0 = k * tk
        if tk % 8 == 0:
            col0 = pl.multiple_of(col0, 8)
        q_blk = q_ref[pl.ds(col0, tk), :]
        acc2_ref[...] += jnp.dot(a_blk, q_blk,
                                 preferred_element_type=jnp.float32)

    @pl.when(jnp.logical_and(p == 1, k == last_k))
    def _fin2():
        post_ref[...] = acc2_ref[...] + b2_ref[...]


def gcn_forward(a_raw, dinv, xw1, b1, w2, b2, *, tm_cap=512, tk_cap=1024):
    n = a_raw.shape[0]
    h = xw1.shape[1]
    tm = _pick_tile(n, tm_cap, 8)     # sublane dim of the A row block
    tk = _pick_tile(n, tk_cap, 128)   # lane dim of the A block (reduction)
    grid = (2, n // tm, n // tk)      # (pass, row block, reduction block)

    dinv_col = dinv.reshape(n, 1)
    dinv_row = dinv.reshape(1, n)

    # All axes "arbitrary": pass 1 needs the complete q scratch, so the grid
    # must not be sharded across TensorCores.  The kernel is HBM-bound anyway.
    cparams = pltpu.CompilerParams(
        dimension_semantics=("arbitrary", "arbitrary", "arbitrary"),
        vmem_limit_bytes=_VMEM_LIMIT_BYTES,
    )

    post = pl.pallas_call(
        _gcn_fused_kernel,
        out_shape=jax.ShapeDtypeStruct((n, 1), jnp.float32),
        grid=grid,
        in_specs=[
            pl.BlockSpec((tm, tk), lambda p, i, k: (i, k)),    # raw A (+I)
            pl.BlockSpec((tm, 1), lambda p, i, k: (i, 0)),     # dinv (rows)
            pl.BlockSpec((1, tk), lambda p, i, k: (0, k)),     # dinv (cols)
            pl.BlockSpec((tk, h), lambda p, i, k: (k, 0)),     # X @ W1
            pl.BlockSpec((1, h), lambda p, i, k: (0, 0)),      # b1
            pl.BlockSpec((h, 1), lambda p, i, k: (0, 0)),      # W2
            pl.BlockSpec((1, 1), lambda p, i, k: (0, 0)),      # b2
        ],
        out_specs=pl.BlockSpec((tm, 1), lambda p, i, k: (i, 0)),
        scratch_shapes=[
            pltpu.VMEM((tm, h), jnp.float32),   # layer-1 accumulator
            pltpu.VMEM((tm, 1), jnp.float32),   # layer-2 accumulator
            pltpu.VMEM((n, 1), jnp.float32),    # q, resident across both passes
        ],
        compiler_params=cparams,
    )(a_raw, dinv_col, dinv_row, xw1, b1, w2, b2)

    return post


# ----------------------------------------------------------------------------
# model2: SIREN-style INR fused with the pair construction.
# Output tile out[i_block, j_block] of shape [TI, TJ]; activations are kept
# channel-major with the pair index in lanes; the TI rows are batched into one
# [H, TI*TJ] slab (30x already folded into the weights in the wrapper):
#   h1 = sin( z_i*a30 + (b30*z_j + c1_30) )        [H, TI*TJ]   (VPU)
#   h2 = sin( V2t30 @ h1 + c2_30 )                 [H, TI*TJ]   (one MXU matmul)
#   o  = V3t @ h2 + c3                             [1, TI*TJ]   (one MXU matmul)
#   out tile written with a single dense [TI, TJ] store.
# ----------------------------------------------------------------------------
def _inr_kernel(zcol_ref, zrow_ref, a30_ref, b30_ref, c130_ref, v2t30_ref,
                c230_ref, v3t_ref, c3_ref, out_ref):
    ti, tj = out_ref.shape

    zj = zrow_ref[...]                                    # [1, TJ]
    base = b30_ref[...] * zj + c130_ref[...]              # [H, TJ]  (j-dependent)
    a30 = a30_ref[...]                                    # [H, 1]
    zi = zcol_ref[...]                                    # [TI, 1]

    # layer-1 sin argument for all TI rows, pair index ii*TJ+j in lanes
    parts = [zi[ii:ii + 1, :] * a30 + base for ii in range(ti)]
    h1 = jnp.sin(jnp.concatenate(parts, axis=1))          # [H, TI*TJ]

    h2 = jnp.sin(jnp.dot(v2t30_ref[...], h1,
                         preferred_element_type=jnp.float32) + c230_ref[...])
    o = jnp.dot(v3t_ref[...], h2,
                preferred_element_type=jnp.float32) + c3_ref[...]   # [1, TI*TJ]

    # de-flatten to [TI, TJ] and write the tile with ONE dense store
    rows = [o[:, ii * tj:(ii + 1) * tj] for ii in range(ti)]
    out_ref[...] = jnp.concatenate(rows, axis=0)


def inr_forward(post, v1, c1, v2, c2, v3, c3, *, tj_cap=256):
    n = post.shape[0]
    h = v1.shape[1]
    # TI=8 keeps the row batch at one sublane group; for n % 8 != 0 we fall
    # back to the full dimension (fine for small n, trap for large awkward n).
    ti = 8 if n % 8 == 0 else n
    tj = _pick_tile(n, tj_cap, 128)   # lane-dense output tile width (sweep 128-512)
    grid = (n // ti, n // tj)

    # 30x SIREN scale folded into grid-invariant weights (one-off wrapper op)
    z_col = post                                  # [N, 1]
    z_row = jnp.transpose(post)                   # [1, N]
    a30 = 30.0 * jnp.transpose(v1[0:1, :])        # [H, 1]
    b30 = 30.0 * jnp.transpose(v1[1:2, :])        # [H, 1]
    c130 = 30.0 * jnp.transpose(c1)               # [H, 1]
    v2t30 = 30.0 * jnp.transpose(v2)              # [H, H]
    c230 = 30.0 * jnp.transpose(c2)               # [H, 1]
    v3t = jnp.transpose(v3)                       # [1, H]
    c3r = jnp.reshape(c3, (1, 1))                 # [1, 1]

    out2d = pl.pallas_call(
        _inr_kernel,
        out_shape=jax.ShapeDtypeStruct((n, n), jnp.float32),
        grid=grid,
        in_specs=[
            pl.BlockSpec((ti, 1), lambda i, j: (i, 0)),    # z (column block)
            pl.BlockSpec((1, tj), lambda i, j: (0, j)),    # z (row block)
            pl.BlockSpec((h, 1), lambda i, j: (0, 0)),     # 30*V1[0,:]^T
            pl.BlockSpec((h, 1), lambda i, j: (0, 0)),     # 30*V1[1,:]^T
            pl.BlockSpec((h, 1), lambda i, j: (0, 0)),     # 30*c1^T
            pl.BlockSpec((h, h), lambda i, j: (0, 0)),     # 30*V2^T
            pl.BlockSpec((h, 1), lambda i, j: (0, 0)),     # 30*c2^T
            pl.BlockSpec((1, h), lambda i, j: (0, 0)),     # V3^T
            pl.BlockSpec((1, 1), lambda i, j: (0, 0)),     # c3
        ],
        out_specs=pl.BlockSpec((ti, tj), lambda i, j: (i, j)),
        compiler_params=pltpu.CompilerParams(
            dimension_semantics=("parallel", "parallel"),
            vmem_limit_bytes=_VMEM_LIMIT_BYTES,
        ),
    )(z_col, z_row, a30, b30, c130, v2t30, c230, v3t, c3r)

    # lane-dense [N, N] slab -> the module's [N*N, 1] layout (free reshape)
    return out2d.reshape(n * n, 1)


# ----------------------------------------------------------------------------
# SIGL forward (glue + kernels)
# ----------------------------------------------------------------------------
def sigl_forward(x, edge_index, params):
    n = x.shape[0]

    # glue: edge_index -> raw (A + I) adjacency and sym-norm scaling vector.
    # The normalized a_hat is NOT materialized; dinv_i * dinv_j is applied
    # per block inside the GCN kernel.
    a = jnp.zeros((n, n), jnp.float32)
    a = a.at[edge_index[0], edge_index[1]].set(1.0)
    a = a + jnp.eye(n, dtype=jnp.float32)
    dinv = 1.0 / jnp.sqrt(jnp.sum(a, axis=1))

    # tiny [N,F_in]@[F_in,H] done once in XLA so the kernel accumulator is a
    # lane-dense (tm, H) tile instead of a lane-starved (tm, F_in) one.
    xw1 = jnp.dot(x, params["w1"])

    # model1 (single fused Pallas kernel; q never leaves VMEM)
    post = gcn_forward(a, dinv, xw1, params["b1"], params["w2"], params["b2"])

    # model2 (Pallas kernel; pair construction fused in-kernel, no [N*N,2]
    # coords tensor is ever materialized)
    out_inr = inr_forward(post, params["v1"], params["c1"],
                          params["v2"], params["c2"],
                          params["v3"], params["c3"])
    # TODO(synk): for very small N a single pallas_call fusing GCN+INR would
    # amortize launch overhead further; kept as two calls for clarity.
    return out_inr, post


# ----------------------------------------------------------------------------
# pure-JAX reference (sanity check of the Pallas kernels)
# ----------------------------------------------------------------------------
def sigl_reference(x, edge_index, params):
    n = x.shape[0]
    a = jnp.zeros((n, n), jnp.float32)
    a = a.at[edge_index[0], edge_index[1]].set(1.0)
    a = a + jnp.eye(n, dtype=jnp.float32)
    dinv = 1.0 / jnp.sqrt(jnp.sum(a, axis=1))
    a_hat = a * dinv[:, None] * dinv[None, :]
    h = jnp.maximum(a_hat @ (x @ params["w1"]) + params["b1"], 0.0)
    post = a_hat @ (h @ params["w2"]) + params["b2"]
    z = post[:, 0]
    coords = jnp.stack([jnp.repeat(z, n), jnp.tile(z, n)], axis=1)
    h1 = jnp.sin(30.0 * (coords @ params["v1"] + params["c1"]))
    h2 = jnp.sin(30.0 * (h1 @ params["v2"] + params["c2"]))
    return h2 @ params["v3"] + params["c3"], post


if __name__ == "__main__":
    N, F_IN, H = 16, 8, 32

    key = jax.random.PRNGKey(0)
    keys = jax.random.split(key, 11)

    # deterministic synthetic parameters (no checkpoints)
    params = {
        "w1": 0.3 * jax.random.normal(keys[0], (F_IN, H), jnp.float32),
        "b1": 0.1 * jax.random.normal(keys[1], (1, H), jnp.float32),
        "w2": 0.3 * jax.random.normal(keys[2], (H, 1), jnp.float32),
        "b2": 0.1 * jax.random.normal(keys[3], (1, 1), jnp.float32),
        "v1": 0.5 * jax.random.normal(keys[4], (2, H), jnp.float32),
        "c1": 0.1 * jax.random.normal(keys[5], (1, H), jnp.float32),
        "v2": (1.0 / H) * jax.random.normal(keys[6], (H, H), jnp.float32),
        "c2": 0.1 * jax.random.normal(keys[7], (1, H), jnp.float32),
        "v3": (1.0 / H) * jax.random.normal(keys[8], (H, 1), jnp.float32),
        "c3": 0.1 * jax.random.normal(keys[9], (1, 1), jnp.float32),
    }

    # deterministic inputs: node features + a bidirectional ring graph
    x = jax.random.normal(keys[10], (N, F_IN), jnp.float32)
    src = jnp.arange(N, dtype=jnp.int32)
    dst = (src + 1) % N
    edge_index = jnp.concatenate(
        [jnp.stack([src, dst], axis=0), jnp.stack([dst, src], axis=0)], axis=1)

    out_inr, out_post = jax.jit(sigl_forward)(x, edge_index, params)
    out_inr = jax.block_until_ready(out_inr)
    out_post = jax.block_until_ready(out_post)

    ref_inr, ref_post = sigl_reference(x, edge_index, params)
    assert out_inr.shape == (N * N, 1) and out_post.shape == (N, 1)
    assert jnp.allclose(out_post, ref_post, atol=1e-2, rtol=1e-2)
    assert jnp.allclose(out_inr, ref_inr, atol=1e-2, rtol=1e-2)

    print("KERNEL_OK")
</pallas_src>

<mosaic_0001>
module attributes {stable_mosaic.version = 11 : i64} {
  func.func @_gcn_fused_kernel(%arg0: i32, %arg1: i32, %arg2: i32, %arg3: memref<16x16xf32, #tpu.memory_space<vmem>>, %arg4: memref<16x1xf32, #tpu.memory_space<vmem>>, %arg5: memref<1x16xf32, #tpu.memory_space<vmem>>, %arg6: memref<16x32xf32, #tpu.memory_space<vmem>>, %arg7: memref<1x32xf32, #tpu.memory_space<vmem>>, %arg8: memref<32x1xf32, #tpu.memory_space<vmem>>, %arg9: memref<1x1xf32, #tpu.memory_space<vmem>>, %arg10: memref<16x1xf32, #tpu.memory_space<vmem>>, %arg11: memref<16x32xf32, #tpu.memory_space<vmem>>, %arg12: memref<16x1xf32, #tpu.memory_space<vmem>>, %arg13: memref<16x1xf32, #tpu.memory_space<vmem>>) attributes {dimension_semantics = [#tpu.dimension_semantics<arbitrary>, #tpu.dimension_semantics<arbitrary>, #tpu.dimension_semantics<arbitrary>], iteration_bounds = array<i64: 2, 1, 1>, scalar_prefetch = 0 : i64, scratch_operands = 3 : i64, tpu.core_type = #tpu.core_type<tc>, window_params = [{transform_indices = @transform_0, window_bounds = array<i64: 16, 16>}, {transform_indices = @transform_1, window_bounds = array<i64: 16, 1>}, {transform_indices = @transform_2, window_bounds = array<i64: 1, 16>}, {transform_indices = @transform_3, window_bounds = array<i64: 16, 32>}, {pipeline_mode = #tpu.pipeline_mode<synchronous>, transform_indices = @transform_4, window_bounds = array<i64: 1, 32>}, {pipeline_mode = #tpu.pipeline_mode<synchronous>, transform_indices = @transform_5, window_bounds = array<i64: 32, 1>}, {pipeline_mode = #tpu.pipeline_mode<synchronous>, transform_indices = @transform_6, window_bounds = array<i64: 1, 1>}, {transform_indices = @transform_7, window_bounds = array<i64: 16, 1>}]} {
    %c0 = arith.constant 0 : index
    %c0_0 = arith.constant 0 : index
    %0 = vector.load %arg3[%c0, %c0_0] : memref<16x16xf32, #tpu.memory_space<vmem>>, vector<16x16xf32>
    %c0_1 = arith.constant 0 : index
    %c0_2 = arith.constant 0 : index
    %1 = vector.load %arg4[%c0_1, %c0_2] : memref<16x1xf32, #tpu.memory_space<vmem>>, vector<16x1xf32>
    %2 = vector.broadcast %1 : vector<16x1xf32> to vector<16x16xf32>
    %3 = arith.mulf %0, %2 : vector<16x16xf32>
    %c0_3 = arith.constant 0 : index
    %c0_4 = arith.constant 0 : index
    %4 = vector.load %arg5[%c0_3, %c0_4] : memref<1x16xf32, #tpu.memory_space<vmem>>, vector<1x16xf32>
    %5 = vector.broadcast %4 : vector<1x16xf32> to vector<16x16xf32>
    %6 = arith.mulf %3, %5 : vector<16x16xf32>
    %c0_i32 = arith.constant 0 : i32
    %7 = arith.cmpi eq, %arg0, %c0_i32 : i32
    %c0_i32_5 = arith.constant 0 : i32
    %8 = arith.cmpi eq, %arg2, %c0_i32_5 : i32
    %9 = arith.andi %7, %8 : i1
    %10 = arith.extui %9 : i1 to i32
    %c0_i32_6 = arith.constant 0 : i32
    %11 = arith.cmpi ne, %10, %c0_i32_6 : i32
    scf.if %11 {
      %cst = arith.constant 0.000000e+00 : f32
      %33 = vector.broadcast %cst : f32 to vector<16x32xf32>
      %c0_19 = arith.constant 0 : index
      %c0_20 = arith.constant 0 : index
      %34 = vector.load %arg11[%c0_19, %c0_20] : memref<16x32xf32, #tpu.memory_space<vmem>>, vector<16x32xf32>
      tpu.vector_store %arg11[%c0_19, %c0_20], %33 {strides = array<i32>} : memref<16x32xf32, #tpu.memory_space<vmem>>, vector<16x32xf32>,
    } else {
    }
    %c0_i32_7 = arith.constant 0 : i32
    %12 = arith.cmpi eq, %arg0, %c0_i32_7 : i32
    %13 = arith.extui %12 : i1 to i32
    %c0_i32_8 = arith.constant 0 : i32
    %14 = arith.cmpi ne, %13, %c0_i32_8 : i32
    scf.if %14 {
      %c0_19 = arith.constant 0 : index
      %c0_20 = arith.constant 0 : index
      %33 = vector.load %arg11[%c0_19, %c0_20] : memref<16x32xf32, #tpu.memory_space<vmem>>, vector<16x32xf32>
      %c0_21 = arith.constant 0 : index
      %c0_22 = arith.constant 0 : index
      %34 = vector.load %arg6[%c0_21, %c0_22] : memref<16x32xf32, #tpu.memory_space<vmem>>, vector<16x32xf32>
      %cst = arith.constant dense<0.000000e+00> : vector<16x32xf32>
      %35 = tpu.matmul %6, %34, %cst {dimension_numbers = #tpu.dot_dimension_numbers<[1], [0], [0], [1], [0, 0, 1, 1], [], []>} : vector<16x16xf32>, vector<16x32xf32>, vector<16x32xf32> -> vector<16x32xf32>
      %36 = arith.addf %33, %35 : vector<16x32xf32>
      %c0_23 = arith.constant 0 : index
      %c0_24 = arith.constant 0 : index
      %37 = vector.load %arg11[%c0_23, %c0_24] : memref<16x32xf32, #tpu.memory_space<vmem>>, vector<16x32xf32>
      tpu.vector_store %arg11[%c0_23, %c0_24], %36 {strides = array<i32>} : memref<16x32xf32, #tpu.memory_space<vmem>>, vector<16x32xf32>,
    } else {
    }
    %c0_i32_9 = arith.constant 0 : i32
    %15 = arith.cmpi eq, %arg0, %c0_i32_9 : i32
    %c0_i32_10 = arith.constant 0 : i32
    %16 = arith.cmpi eq, %arg2, %c0_i32_10 : i32
    %17 = arith.andi %15, %16 : i1
    %18 = arith.extui %17 : i1 to i32
    %c0_i32_11 = arith.constant 0 : i32
    %19 = arith.cmpi ne, %18, %c0_i32_11 : i32
    scf.if %19 {
      %c0_19 = arith.constant 0 : index
      %c0_20 = arith.constant 0 : index
      %33 = vector.load %arg11[%c0_19, %c0_20] : memref<16x32xf32, #tpu.memory_space<vmem>>, vector<16x32xf32>
      %c0_21 = arith.constant 0 : index
      %c0_22 = arith.constant 0 : index
      %34 = vector.load %arg7[%c0_21, %c0_22] : memref<1x32xf32, #tpu.memory_space<vmem>>, vector<1x32xf32>
      %35 = vector.broadcast %34 : vector<1x32xf32> to vector<16x32xf32>
      %36 = arith.addf %33, %35 : vector<16x32xf32>
      %cst = arith.constant 0.000000e+00 : f32
      %37 = vector.broadcast %cst : f32 to vector<16x32xf32>
      %38 = arith.maximumf %36, %37 : vector<16x32xf32>
      %c16_i32 = arith.constant 16 : i32
      %39 = arith.muli %arg1, %c16_i32 : i32
      %40 = tpu.assume_multiple %39, 8 : i32
      %c0_23 = arith.constant 0 : index
      %c0_24 = arith.constant 0 : index
      %41 = vector.load %arg8[%c0_23, %c0_24] : memref<32x1xf32, #tpu.memory_space<vmem>>, vector<32x1xf32>
      %cst_25 = arith.constant dense<0.000000e+00> : vector<16x1xf32>
      %42 = tpu.matmul %38, %41, %cst_25 {dimension_numbers = #tpu.dot_dimension_numbers<[1], [0], [0], [1], [0, 0, 1, 1], [], []>} : vector<16x32xf32>, vector<32x1xf32>, vector<16x1xf32> -> vector<16x1xf32>
      %43 = arith.index_cast %40 : i32 to index
      %c0_26 = arith.constant 0 : index
      %44 = vector.load %arg13[%43, %c0_26] : memref<16x1xf32, #tpu.memory_space<vmem>>, vector<16x1xf32>
      tpu.vector_store %arg13[%43, %c0_26], %42 {strides = array<i32>} : memref<16x1xf32, #tpu.memory_space<vmem>>, vector<16x1xf32>,
      %cst_27 = arith.constant 0.000000e+00 : f32
      %45 = vector.broadcast %cst_27 : f32 to vector<16x1xf32>
      %c0_28 = arith.constant 0 : index
      %c0_29 = arith.constant 0 : index
      %46 = vector.load %arg10[%c0_28, %c0_29] : memref<16x1xf32, #tpu.memory_space<vmem>>, vector<16x1xf32>
      tpu.vector_store %arg10[%c0_28, %c0_29], %45 {strides = array<i32>} : memref<16x1xf32, #tpu.memory_space<vmem>>, vector<16x1xf32>,
    } else {
    }
    %c1_i32 = arith.constant 1 : i32
    %20 = arith.cmpi eq, %arg0, %c1_i32 : i32
    %c0_i32_12 = arith.constant 0 : i32
    %21 = arith.cmpi eq, %arg2, %c0_i32_12 : i32
    %22 = arith.andi %20, %21 : i1
    %23 = arith.extui %22 : i1 to i32
    %c0_i32_13 = arith.constant 0 : i32
    %24 = arith.cmpi ne, %23, %c0_i32_13 : i32
    scf.if %24 {
      %cst = arith.constant 0.000000e+00 : f32
      %33 = vector.broadcast %cst : f32 to vector<16x1xf32>
      %c0_19 = arith.constant 0 : index
      %c0_20 = arith.constant 0 : index
      %34 = vector.load %arg12[%c0_19, %c0_20] : memref<16x1xf32, #tpu.memory_space<vmem>>, vector<16x1xf32>
      tpu.vector_store %arg12[%c0_19, %c0_20], %33 {strides = array<i32>} : memref<16x1xf32, #tpu.memory_space<vmem>>, vector<16x1xf32>,
    } else {
    }
    %c1_i32_14 = arith.constant 1 : i32
    %25 = arith.cmpi eq, %arg0, %c1_i32_14 : i32
    %26 = arith.extui %25 : i1 to i32
    %c0_i32_15 = arith.constant 0 : i32
    %27 = arith.cmpi ne, %26, %c0_i32_15 : i32
    scf.if %27 {
      %c16_i32 = arith.constant 16 : i32
      %33 = arith.muli %arg2, %c16_i32 : i32
      %34 = tpu.assume_multiple %33, 8 : i32
      %35 = arith.index_cast %34 : i32 to index
      %c0_19 = arith.constant 0 : index
      %36 = vector.load %arg13[%35, %c0_19] : memref<16x1xf32, #tpu.memory_space<vmem>>, vector<16x1xf32>
      %c0_20 = arith.constant 0 : index
      %c0_21 = arith.constant 0 : index
      %37 = vector.load %arg12[%c0_20, %c0_21] : memref<16x1xf32, #tpu.memory_space<vmem>>, vector<16x1xf32>
      %cst = arith.constant dense<0.000000e+00> : vector<16x1xf32>
      %38 = tpu.matmul %6, %36, %cst {dimension_numbers = #tpu.dot_dimension_numbers<[1], [0], [0], [1], [0, 0, 1, 1], [], []>} : vector<16x16xf32>, vector<16x1xf32>, vector<16x1xf32> -> vector<16x1xf32>
      %39 = arith.addf %37, %38 : vector<16x1xf32>
      %c0_22 = arith.constant 0 : index
      %c0_23 = arith.constant 0 : index
      %40 = vector.load %arg12[%c0_22, %c0_23] : memref<16x1xf32, #tpu.memory_space<vmem>>, vector<16x1xf32>
      tpu.vector_store %arg12[%c0_22, %c0_23], %39 {strides = array<i32>} : memref<16x1xf32, #tpu.memory_space<vmem>>, vector<16x1xf32>,
    } else {
    }
    %c1_i32_16 = arith.constant 1 : i32
    %28 = arith.cmpi eq, %arg0, %c1_i32_16 : i32
    %c0_i32_17 = arith.constant 0 : i32
    %29 = arith.cmpi eq, %arg2, %c0_i32_17 : i32
    %30 = arith.andi %28, %29 : i1
    %31 = arith.extui %30 : i1 to i32
    %c0_i32_18 = arith.constant 0 : i32
    %32 = arith.cmpi ne, %31, %c0_i32_18 : i32
    scf.if %32 {
      %c0_19 = arith.constant 0 : index
      %c0_20 = arith.constant 0 : index
      %33 = vector.load %arg12[%c0_19, %c0_20] : memref<16x1xf32, #tpu.memory_space<vmem>>, vector<16x1xf32>
      %c0_21 = arith.constant 0 : index
      %c0_22 = arith.constant 0 : index
      %34 = vector.load %arg9[%c0_21, %c0_22] : memref<1x1xf32, #tpu.memory_space<vmem>>, vector<1x1xf32>
      %35 = vector.broadcast %34 : vector<1x1xf32> to vector<16x1xf32>
      %36 = arith.addf %33, %35 : vector<16x1xf32>
      %c0_23 = arith.constant 0 : index
      %c0_24 = arith.constant 0 : index
      %37 = vector.load %arg10[%c0_23, %c0_24] : memref<16x1xf32, #tpu.memory_space<vmem>>, vector<16x1xf32>
      tpu.vector_store %arg10[%c0_23, %c0_24], %36 {strides = array<i32>} : memref<16x1xf32, #tpu.memory_space<vmem>>, vector<16x1xf32>,
    } else {
    }
    return
  }
  func.func @transform_0(%arg0: i32, %arg1: i32, %arg2: i32) -> (i32, i32) {
    %c0_i32 = arith.constant 0 : i32
    return %arg1, %arg2 : i32, i32
  }
  func.func @transform_1(%arg0: i32, %arg1: i32, %arg2: i32) -> (i32, i32) {
    %c0_i32 = arith.constant 0 : i32
    %c0_i32_0 = arith.constant 0 : i32
    return %arg1, %c0_i32 : i32, i32
  }
  func.func @transform_2(%arg0: i32, %arg1: i32, %arg2: i32) -> (i32, i32) {
    %c0_i32 = arith.constant 0 : i32
    %c0_i32_0 = arith.constant 0 : i32
    return %c0_i32, %arg2 : i32, i32
  }
  func.func @transform_3(%arg0: i32, %arg1: i32, %arg2: i32) -> (i32, i32) {
    %c0_i32 = arith.constant 0 : i32
    %c0_i32_0 = arith.constant 0 : i32
    return %arg2, %c0_i32 : i32, i32
  }
  func.func @transform_4(%arg0: i32, %arg1: i32, %arg2: i32) -> (i32, i32) {
    %c0_i32 = arith.constant 0 : i32
    %c0_i32_0 = arith.constant 0 : i32
    %c0_i32_1 = arith.constant 0 : i32
    return %c0_i32, %c0_i32_0 : i32, i32
  }
  func.func @transform_5(%arg0: i32, %arg1: i32, %arg2: i32) -> (i32, i32) {
    %c0_i32 = arith.constant 0 : i32
    %c0_i32_0 = arith.constant 0 : i32
    %c0_i32_1 = arith.constant 0 : i32
    return %c0_i32, %c0_i32_0 : i32, i32
  }
  func.func @transform_6(%arg0: i32, %arg1: i32, %arg2: i32) -> (i32, i32) {
    %c0_i32 = arith.constant 0 : i32
    %c0_i32_0 = arith.constant 0 : i32
    %c0_i32_1 = arith.constant 0 : i32
    return %c0_i32, %c0_i32_0 : i32, i32
  }
  func.func @transform_7(%arg0: i32, %arg1: i32, %arg2: i32) -> (i32, i32) {
    %c0_i32 = arith.constant 0 : i32
    %c0_i32_0 = arith.constant 0 : i32
    return %arg1, %c0_i32 : i32, i32
  }
}

module attributes {stable_mosaic.version = 11 : i64} {
  func.func @_inr_kernel(%arg0: i32, %arg1: i32, %arg2: memref<8x1xf32, #tpu.memory_space<vmem>>, %arg3: memref<1x16xf32, #tpu.memory_space<vmem>>, %arg4: memref<32x1xf32, #tpu.memory_space<vmem>>, %arg5: memref<32x1xf32, #tpu.memory_space<vmem>>, %arg6: memref<32x1xf32, #tpu.memory_space<vmem>>, %arg7: memref<32x32xf32, #tpu.memory_space<vmem>>, %arg8: memref<32x1xf32, #tpu.memory_space<vmem>>, %arg9: memref<1x32xf32, #tpu.memory_space<vmem>>, %arg10: memref<1x1xf32, #tpu.memory_space<vmem>>, %arg11: memref<8x16xf32, #tpu.memory_space<vmem>>) attributes {dimension_semantics = [#tpu.dimension_semantics<parallel>, #tpu.dimension_semantics<parallel>], iteration_bounds = array<i64: 2, 1>, scalar_prefetch = 0 : i64, scratch_operands = 0 : i64, tpu.core_type = #tpu.core_type<tc>, window_params = [{transform_indices = @transform_0, window_bounds = array<i64: 8, 1>}, {transform_indices = @transform_1, window_bounds = array<i64: 1, 16>}, {pipeline_mode = #tpu.pipeline_mode<synchronous>, transform_indices = @transform_2, window_bounds = array<i64: 32, 1>}, {pipeline_mode = #tpu.pipeline_mode<synchronous>, transform_indices = @transform_3, window_bounds = array<i64: 32, 1>}, {pipeline_mode = #tpu.pipeline_mode<synchronous>, transform_indices = @transform_4, window_bounds = array<i64: 32, 1>}, {pipeline_mode = #tpu.pipeline_mode<synchronous>, transform_indices = @transform_5, window_bounds = array<i64: 32, 32>}, {pipeline_mode = #tpu.pipeline_mode<synchronous>, transform_indices = @transform_6, window_bounds = array<i64: 32, 1>}, {pipeline_mode = #tpu.pipeline_mode<synchronous>, transform_indices = @transform_7, window_bounds = array<i64: 1, 32>}, {pipeline_mode = #tpu.pipeline_mode<synchronous>, transform_indices = @transform_8, window_bounds = array<i64: 1, 1>}, {transform_indices = @transform_9, window_bounds = array<i64: 8, 16>}]} {
    %c0 = arith.constant 0 : index
    %c0_0 = arith.constant 0 : index
    %0 = vector.load %arg3[%c0, %c0_0] : memref<1x16xf32, #tpu.memory_space<vmem>>, vector<1x16xf32>
    %c0_1 = arith.constant 0 : index
    %c0_2 = arith.constant 0 : index
    %1 = vector.load %arg5[%c0_1, %c0_2] : memref<32x1xf32, #tpu.memory_space<vmem>>, vector<32x1xf32>
    %2 = vector.broadcast %1 : vector<32x1xf32> to vector<32x16xf32>
    %3 = vector.broadcast %0 : vector<1x16xf32> to vector<32x16xf32>
    %4 = arith.mulf %2, %3 : vector<32x16xf32>
    %c0_3 = arith.constant 0 : index
    %c0_4 = arith.constant 0 : index
    %5 = vector.load %arg6[%c0_3, %c0_4] : memref<32x1xf32, #tpu.memory_space<vmem>>, vector<32x1xf32>
    %6 = vector.broadcast %5 : vector<32x1xf32> to vector<32x16xf32>
    %7 = arith.addf %4, %6 : vector<32x16xf32>
    %c0_5 = arith.constant 0 : index
    %c0_6 = arith.constant 0 : index
    %8 = vector.load %arg4[%c0_5, %c0_6] : memref<32x1xf32, #tpu.memory_space<vmem>>, vector<32x1xf32>
    %c0_7 = arith.constant 0 : index
    %c0_8 = arith.constant 0 : index
    %9 = vector.load %arg2[%c0_7, %c0_8] : memref<8x1xf32, #tpu.memory_space<vmem>>, vector<8x1xf32>
    %10 = vector.extract_strided_slice %9 {offsets = [0, 0], sizes = [1, 1], strides = [1, 1]} : vector<8x1xf32> to vector<1x1xf32>
    %11 = vector.broadcast %10 : vector<1x1xf32> to vector<32x1xf32>
    %12 = arith.mulf %11, %8 : vector<32x1xf32>
    %13 = vector.broadcast %12 : vector<32x1xf32> to vector<32x16xf32>
    %14 = arith.addf %13, %7 : vector<32x16xf32>
    %15 = vector.extract_strided_slice %9 {offsets = [1, 0], sizes = [1, 1], strides = [1, 1]} : vector<8x1xf32> to vector<1x1xf32>
    %16 = vector.broadcast %15 : vector<1x1xf32> to vector<32x1xf32>
    %17 = arith.mulf %16, %8 : vector<32x1xf32>
    %18 = vector.broadcast %17 : vector<32x1xf32> to vector<32x16xf32>
    %19 = arith.addf %18, %7 : vector<32x16xf32>
    %20 = vector.extract_strided_slice %9 {offsets = [2, 0], sizes = [1, 1], strides = [1, 1]} : vector<8x1xf32> to vector<1x1xf32>
    %21 = vector.broadcast %20 : vector<1x1xf32> to vector<32x1xf32>
    %22 = arith.mulf %21, %8 : vector<32x1xf32>
    %23 = vector.broadcast %22 : vector<32x1xf32> to vector<32x16xf32>
    %24 = arith.addf %23, %7 : vector<32x16xf32>
    %25 = vector.extract_strided_slice %9 {offsets = [3, 0], sizes = [1, 1], strides = [1, 1]} : vector<8x1xf32> to vector<1x1xf32>
    %26 = vector.broadcast %25 : vector<1x1xf32> to vector<32x1xf32>
    %27 = arith.mulf %26, %8 : vector<32x1xf32>
    %28 = vector.broadcast %27 : vector<32x1xf32> to vector<32x16xf32>
    %29 = arith.addf %28, %7 : vector<32x16xf32>
    %30 = vector.extract_strided_slice %9 {offsets = [4, 0], sizes = [1, 1], strides = [1, 1]} : vector<8x1xf32> to vector<1x1xf32>
    %31 = vector.broadcast %30 : vector<1x1xf32> to vector<32x1xf32>
    %32 = arith.mulf %31, %8 : vector<32x1xf32>
    %33 = vector.broadcast %32 : vector<32x1xf32> to vector<32x16xf32>
    %34 = arith.addf %33, %7 : vector<32x16xf32>
    %35 = vector.extract_strided_slice %9 {offsets = [5, 0], sizes = [1, 1], strides = [1, 1]} : vector<8x1xf32> to vector<1x1xf32>
    %36 = vector.broadcast %35 : vector<1x1xf32> to vector<32x1xf32>
    %37 = arith.mulf %36, %8 : vector<32x1xf32>
    %38 = vector.broadcast %37 : vector<32x1xf32> to vector<32x16xf32>
    %39 = arith.addf %38, %7 : vector<32x16xf32>
    %40 = vector.extract_strided_slice %9 {offsets = [6, 0], sizes = [1, 1], strides = [1, 1]} : vector<8x1xf32> to vector<1x1xf32>
    %41 = vector.broadcast %40 : vector<1x1xf32> to vector<32x1xf32>
    %42 = arith.mulf %41, %8 : vector<32x1xf32>
    %43 = vector.broadcast %42 : vector<32x1xf32> to vector<32x16xf32>
    %44 = arith.addf %43, %7 : vector<32x16xf32>
    %45 = vector.extract_strided_slice %9 {offsets = [7, 0], sizes = [1, 1], strides = [1, 1]} : vector<8x1xf32> to vector<1x1xf32>
    %46 = vector.broadcast %45 : vector<1x1xf32> to vector<32x1xf32>
    %47 = arith.mulf %46, %8 : vector<32x1xf32>
    %48 = vector.broadcast %47 : vector<32x1xf32> to vector<32x16xf32>
    %49 = arith.addf %48, %7 : vector<32x16xf32>
    %50 = tpu.concatenate %14, %19, %24, %29, %34, %39, %44, %49 in 1 : vector<32x16xf32>, vector<32x16xf32>, vector<32x16xf32>, vector<32x16xf32>, vector<32x16xf32>, vector<32x16xf32>, vector<32x16xf32>, vector<32x16xf32> -> vector<32x128xf32>
    %51 = math.sin %50 : vector<32x128xf32>
    %c0_9 = arith.constant 0 : index
    %c0_10 = arith.constant 0 : index
    %52 = vector.load %arg7[%c0_9, %c0_10] : memref<32x32xf32, #tpu.memory_space<vmem>>, vector<32x32xf32>
    %cst = arith.constant dense<0.000000e+00> : vector<32x128xf32>
    %53 = tpu.matmul %52, %51, %cst {dimension_numbers = #tpu.dot_dimension_numbers<[1], [0], [0], [1], [0, 0, 1, 1], [], []>} : vector<32x32xf32>, vector<32x128xf32>, vector<32x128xf32> -> vector<32x128xf32>
    %c0_11 = arith.constant 0 : index
    %c0_12 = arith.constant 0 : index
    %54 = vector.load %arg8[%c0_11, %c0_12] : memref<32x1xf32, #tpu.memory_space<vmem>>, vector<32x1xf32>
    %55 = vector.broadcast %54 : vector<32x1xf32> to vector<32x128xf32>
    %56 = arith.addf %53, %55 : vector<32x128xf32>
    %57 = math.sin %56 : vector<32x128xf32>
    %c0_13 = arith.constant 0 : index
    %c0_14 = arith.constant 0 : index
    %58 = vector.load %arg9[%c0_13, %c0_14] : memref<1x32xf32, #tpu.memory_space<vmem>>, vector<1x32xf32>
    %cst_15 = arith.constant dense<0.000000e+00> : vector<1x128xf32>
    %59 = tpu.matmul %58, %57, %cst_15 {dimension_numbers = #tpu.dot_dimension_numbers<[1], [0], [0], [1], [0, 0, 1, 1], [], []>} : vector<1x32xf32>, vector<32x128xf32>, vector<1x128xf32> -> vector<1x128xf32>
    %c0_16 = arith.constant 0 : index
    %c0_17 = arith.constant 0 : index
    %60 = vector.load %arg10[%c0_16, %c0_17] : memref<1x1xf32, #tpu.memory_space<vmem>>, vector<1x1xf32>
    %61 = vector.broadcast %60 : vector<1x1xf32> to vector<1x128xf32>
    %62 = arith.addf %59, %61 : vector<1x128xf32>
    %63 = vector.extract_strided_slice %62 {offsets = [0, 0], sizes = [1, 16], strides = [1, 1]} : vector<1x128xf32> to vector<1x16xf32>
    %64 = vector.extract_strided_slice %62 {offsets = [0, 16], sizes = [1, 16], strides = [1, 1]} : vector<1x128xf32> to vector<1x16xf32>
    %65 = vector.extract_strided_slice %62 {offsets = [0, 32], sizes = [1, 16], strides = [1, 1]} : vector<1x128xf32> to vector<1x16xf32>
    %66 = vector.extract_strided_slice %62 {offsets = [0, 48], sizes = [1, 16], strides = [1, 1]} : vector<1x128xf32> to vector<1x16xf32>
    %67 = vector.extract_strided_slice %62 {offsets = [0, 64], sizes = [1, 16], strides = [1, 1]} : vector<1x128xf32> to vector<1x16xf32>
    %68 = vector.extract_strided_slice %62 {offsets = [0, 80], sizes = [1, 16], strides = [1, 1]} : vector<1x128xf32> to vector<1x16xf32>
    %69 = vector.extract_strided_slice %62 {offsets = [0, 96], sizes = [1, 16], strides = [1, 1]} : vector<1x128xf32> to vector<1x16xf32>
    %70 = vector.extract_strided_slice %62 {offsets = [0, 112], sizes = [1, 16], strides = [1, 1]} : vector<1x128xf32> to vector<1x16xf32>
    %71 = tpu.concatenate %63, %64, %65, %66, %67, %68, %69, %70 in 0 : vector<1x16xf32>, vector<1x16xf32>, vector<1x16xf32>, vector<1x16xf32>, vector<1x16xf32>, vector<1x16xf32>, vector<1x16xf32>, vector<1x16xf32> -> vector<8x16xf32>
    %c0_18 = arith.constant 0 : index
    %c0_19 = arith.constant 0 : index
    %72 = vector.load %arg11[%c0_18, %c0_19] : memref<8x16xf32, #tpu.memory_space<vmem>>, vector<8x16xf32>
    tpu.vector_store %arg11[%c0_18, %c0_19], %71 {strides = array<i32>} : memref<8x16xf32, #tpu.memory_space<vmem>>, vector<8x16xf32>,
    return
  }
  func.func @transform_0(%arg0: i32, %arg1: i32) -> (i32, i32) {
    %c0_i32 = arith.constant 0 : i32
    %c0_i32_0 = arith.constant 0 : i32
    return %arg0, %c0_i32 : i32, i32
  }
  func.func @transform_1(%arg0: i32, %arg1: i32) -> (i32, i32) {
    %c0_i32 = arith.constant 0 : i32
    %c0_i32_0 = arith.constant 0 : i32
    return %c0_i32, %arg1 : i32, i32
  }
  func.func @transform_2(%arg0: i32, %arg1: i32) -> (i32, i32) {
    %c0_i32 = arith.constant 0 : i32
    %c0_i32_0 = arith.constant 0 : i32
    %c0_i32_1 = arith.constant 0 : i32
    return %c0_i32, %c0_i32_0 : i32, i32
  }
  func.func @transform_3(%arg0: i32, %arg1: i32) -> (i32, i32) {
    %c0_i32 = arith.constant 0 : i32
    %c0_i32_0 = arith.constant 0 : i32
    %c0_i32_1 = arith.constant 0 : i32
    return %c0_i32, %c0_i32_0 : i32, i32
  }
  func.func @transform_4(%arg0: i32, %arg1: i32) -> (i32, i32) {
    %c0_i32 = arith.constant 0 : i32
    %c0_i32_0 = arith.constant 0 : i32
    %c0_i32_1 = arith.constant 0 : i32
    return %c0_i32, %c0_i32_0 : i32, i32
  }
  func.func @transform_5(%arg0: i32, %arg1: i32) -> (i32, i32) {
    %c0_i32 = arith.constant 0 : i32
    %c0_i32_0 = arith.constant 0 : i32
    %c0_i32_1 = arith.constant 0 : i32
    return %c0_i32, %c0_i32_0 : i32, i32
  }
  func.func @transform_6(%arg0: i32, %arg1: i32) -> (i32, i32) {
    %c0_i32 = arith.constant 0 : i32
    %c0_i32_0 = arith.constant 0 : i32
    %c0_i32_1 = arith.constant 0 : i32
    return %c0_i32, %c0_i32_0 : i32, i32
  }
  func.func @transform_7(%arg0: i32, %arg1: i32) -> (i32, i32) {
    %c0_i32 = arith.constant 0 : i32
    %c0_i32_0 = arith.constant 0 : i32
    %c0_i32_1 = arith.constant 0 : i32
    return %c0_i32, %c0_i32_0 : i32, i32
  }
  func.func @transform_8(%arg0: i32, %arg1: i32) -> (i32, i32) {
    %c0_i32 = arith.constant 0 : i32
    %c0_i32_0 = arith.constant 0 : i32
    %c0_i32_1 = arith.constant 0 : i32
    return %c0_i32, %c0_i32_0 : i32, i32
  }
  func.func @transform_9(%arg0: i32, %arg1: i32) -> (i32, i32) {
    %c0_i32 = arith.constant 0 : i32
    return %arg0, %arg1 : i32, i32
  }
}

</mosaic_0001>

<llo_original>
// kernel: sigl_forward.2
$region0: #{sigl_forward.2}
  #allocation0 [shape = 'u32[]', space=smem, size = 0x4, offset = 0x4, fixed_abs, tag = 'smem constant byte address 0x4 - core index']
  #allocation1 [shape = 'u32[72,128]{1,0:T(1,128)}', space=vmem, size = 0x9000, scoped, tag = 'internal scratch']
  #allocation2 [shape = 'f32[16,32]{1,0:T(8,128)}', space=vmem, size = 0x2000, scoped, tag = 'scratch operand']
  #allocation3 [shape = 'f32[16,1]{1,0:T(8,128)}', space=vmem, size = 0x2000, scoped, tag = 'scratch operand']
  #allocation4 [shape = 'f32[16,1]{1,0:T(8,128)}', space=vmem, size = 0x2000, scoped, tag = 'scratch operand']
  #allocation5 [shape = 'f32[1,1]{1,0:T(1,128)S(1)}', space=vmem, size = 0x200, scoped, tag = 'scoped memory for sigl_forward.2']
  %s0 = inlined_call_operand.vmem [shape: f32[16,16], index: 0, kind: input, shape index: {}]
  %s1 = inlined_call_operand.vmem [shape: f32[16,1], index: 1, kind: input, shape index: {}]
  %s2 = inlined_call_operand.vmem [shape: f32[1,16], index: 2, kind: input, shape index: {}]
  %s3 = inlined_call_operand.vmem [shape: f32[16,32], index: 3, kind: input, shape index: {}]
  %s4 = inlined_call_operand.vmem [shape: f32[1,32], index: 4, kind: input, shape index: {}]
  %s5 = inlined_call_operand.vmem [shape: f32[32,1], index: 5, kind: input, shape index: {}]
  %s6 = inlined_call_operand.<no memory space> [shape: f32[1,1], index: 6, kind: input, shape index: {}]
  %s7 = inlined_call_operand.vmem [shape: f32[16,1], index: 7, kind: output, shape index: {}]
  %s8 = sld [smem:[#allocation0]]
  $region85: #{sigl_forward.2} parent=0
    _
  %s10 = ssub.s32 1, %s8
  %s11 = scalar_select 0, %s10, %s8
  %v12 = vstv %s6
  %13 = vst [vmem:[#allocation5] sm:$0x1] %v12
  loop: start=0, step=1, limit=4
  $region2: #{sigl_forward.2} parent=0 // loop_pre_header
    _
  $region3: #{sigl_forward.2} parent=0 // loop_header
    %s15 = sphi 0, %s19
    %p16 = scmp.ge.s32.totalorder %s15, 4
    %s22 = sphi 0, %s41
    %s23 = sphi 0, %s37
    %s24 = sphi 0, %s33
    %s25 = sphi 0, %s22
    %s26 = sphi 0, %s23
    %s27 = sphi 0, %s24
    %s28 = sphi 0, %s25
    %s29 = sphi 0, %s26
    %s30 = sphi 0, %s27
    %s46 = sphi 0, %s48
    %s49 = sphi 0, %s46
    %s50 = sphi 0, %s49
    %s66 = sphi 0, %s50
    %s72 = sphi 0, %s74
    %s75 = sphi 0, %s72
    %s76 = sphi 0, %s75
    %s92 = sphi 0, %s76
    %s98 = sphi 0, %s100
    %s101 = sphi 0, %s98
    %s102 = sphi 0, %s101
    %s118 = sphi 0, %s102
    %s124 = sphi 0, %s126
    %s127 = sphi 0, %s124
    %s128 = sphi 0, %s127
    %s144 = sphi 0, %s128
    %s148 = sphi 0, %s148
    %s150 = sphi 0, %s148
    %s151 = sphi 0, %s150
    %s165 = sphi 0, %s151
    %s169 = sphi 0, %s169
    %s171 = sphi 0, %s169
    %s172 = sphi 0, %s171
    %s186 = sphi 0, %s172
    %s190 = sphi 0, %s190
    %s192 = sphi 0, %s190
    %s193 = sphi 0, %s192
    %s207 = sphi 0, %s193
    %s213 = sphi 0, %s215
    %s216 = sphi 0, %s213
    %s217 = sphi 0, %s216
    %s233 = sphi 0, %s217
  $region4: #{sigl_forward.2} parent=0 // loop_header_branch
    %18 = sbr.rel (%p16) target = $region8
  $region5: #{sigl_forward.2} parent=0 // loop_body
    %s20 = ssub.s32 %s15, 1
    %s21 = ssub.s32 %s15, 2
    %s31 = sadd.s32 1, %s24
    %p32 = scmp.ge.s32.totalorder %s31, 1
    %s33 = scalar_select %p32, 0, %s31
    %s34 = sadd.s32 1, %s23
    %s35 = scalar_select %p32, %s34, %s23
    %p36 = scmp.ge.s32.totalorder %s35, 1
    %s37 = scalar_select %p36, 0, %s35
    %s38 = sadd.s32 1, %s22
    %s39 = scalar_select %p36, %s38, %s22
    %p40 = scmp.ge.s32.totalorder %s39, 2
    %s41 = scalar_select %p40, 0, %s39
    %s42 = ssub.s32 %s23, %s37
    %s43 = ssub.s32 %s24, %s33
    %s44 = sor.u32 %s42, %s43
    %p45 = scmp.eq.s32.totalorder %s44, 0
    %s47 = sadd.s32 %s46, 1
    %s48 = scalar_select %p45, %s46, %s47
    %p51 = pneg %p45
    %p52 = scmp.eq.s32.totalorder %s15, 1
    %p53 = por %p51, %p52
    %p54 = scmp.ne.s32.totalorder %s46, %s49
    %p55 = scmp.eq.s32.totalorder %s15, 0
    %p56 = por %p54, %p55
    %p57 = scmp.ne.s32.totalorder %s46, %s49
    %p58 = scmp.eq.s32.totalorder %s20, 1
    %p59 = por %p57, %p58
    %p60 = scmp.ne.s32.totalorder %s49, %s50
    %p61 = scmp.eq.s32.totalorder %s20, 0
    %p62 = por %p60, %p61
    %p63 = scmp.ne.s32.totalorder %s49, %s50
    %p64 = scmp.eq.s32.totalorder %s21, 1
    %p65 = por %p63, %p64
    %p67 = scmp.ne.s32.totalorder %s50, %s66
    %p68 = scmp.eq.s32.totalorder %s21, 0
    %p69 = por %p67, %p68
    %s70 = ssub.s32 %s23, %s37
    %p71 = scmp.eq.s32.totalorder %s70, 0
    %s73 = sadd.s32 %s72, 1
    %s74 = scalar_select %p71, %s72, %s73
    %p77 = pneg %p71
    %p78 = scmp.eq.s32.totalorder %s15, 1
    %p79 = por %p77, %p78
    %p80 = scmp.ne.s32.totalorder %s72, %s75
    %p81 = scmp.eq.s32.totalorder %s15, 0
    %p82 = por %p80, %p81
    %p83 = scmp.ne.s32.totalorder %s72, %s75
    %p84 = scmp.eq.s32.totalorder %s20, 1
    %p85 = por %p83, %p84
    %p86 = scmp.ne.s32.totalorder %s75, %s76
    %p87 = scmp.eq.s32.totalorder %s20, 0
    %p88 = por %p86, %p87
    %p89 = scmp.ne.s32.totalorder %s75, %s76
    %p90 = scmp.eq.s32.totalorder %s21, 1
    %p91 = por %p89, %p90
    %p93 = scmp.ne.s32.totalorder %s76, %s92
    %p94 = scmp.eq.s32.totalorder %s21, 0
    %p95 = por %p93, %p94
    %s96 = ssub.s32 %s24, %s33
    %p97 = scmp.eq.s32.totalorder %s96, 0
    %s99 = sadd.s32 %s98, 1
    %s100 = scalar_select %p97, %s98, %s99
    %p103 = pneg %p97
    %p104 = scmp.eq.s32.totalorder %s15, 1
    %p105 = por %p103, %p104
    %p106 = scmp.ne.s32.totalorder %s98, %s101
    %p107 = scmp.eq.s32.totalorder %s15, 0
    %p108 = por %p106, %p107
    %p109 = scmp.ne.s32.totalorder %s98, %s101
    %p110 = scmp.eq.s32.totalorder %s20, 1
    %p111 = por %p109, %p110
    %p112 = scmp.ne.s32.totalorder %s101, %s102
    %p113 = scmp.eq.s32.totalorder %s20, 0
    %p114 = por %p112, %p113
    %p115 = scmp.ne.s32.totalorder %s101, %s102
    %p116 = scmp.eq.s32.totalorder %s21, 1
    %p117 = por %p115, %p116
    %p119 = scmp.ne.s32.totalorder %s102, %s118
    %p120 = scmp.eq.s32.totalorder %s21, 0
    %p121 = por %p119, %p120
    %s122 = ssub.s32 %s24, %s33
    %p123 = scmp.eq.s32.totalorder %s122, 0
    %s125 = sadd.s32 %s124, 1
    %s126 = scalar_select %p123, %s124, %s125
    %p129 = pneg %p123
    %p130 = scmp.eq.s32.totalorder %s15, 1
    %p131 = por %p129, %p130
    %p132 = scmp.ne.s32.totalorder %s124, %s127
    %p133 = scmp.eq.s32.totalorder %s15, 0
    %p134 = por %p132, %p133
    %p135 = scmp.ne.s32.totalorder %s124, %s127
    %p136 = scmp.eq.s32.totalorder %s20, 1
    %p137 = por %p135, %p136
    %p138 = scmp.ne.s32.totalorder %s127, %s128
    %p139 = scmp.eq.s32.totalorder %s20, 0
    %p140 = por %p138, %p139
    %p141 = scmp.ne.s32.totalorder %s127, %s128
    %p142 = scmp.eq.s32.totalorder %s21, 1
    %p143 = por %p141, %p142
    %p145 = scmp.ne.s32.totalorder %s128, %s144
    %p146 = scmp.eq.s32.totalorder %s21, 0
    %p147 = por %p145, %p146
    %s149 = sadd.s32 %s148, 1
    %p152 = scmp.eq.s32.totalorder %s15, 1
    %p153 = scmp.ne.s32.totalorder %s148, %s150
    %p154 = scmp.eq.s32.totalorder %s15, 0
    %p155 = por %p153, %p154
    %p156 = scmp.ne.s32.totalorder %s148, %s150
    %p157 = scmp.eq.s32.totalorder %s20, 1
    %p158 = por %p156, %p157
    %p159 = scmp.ne.s32.totalorder %s150, %s151
    %p160 = scmp.eq.s32.totalorder %s20, 0
    %p161 = por %p159, %p160
    %p162 = scmp.ne.s32.totalorder %s150, %s151
    %p163 = scmp.eq.s32.totalorder %s21, 1
    %p164 = por %p162, %p163
    %p166 = scmp.ne.s32.totalorder %s151, %s165
    %p167 = scmp.eq.s32.totalorder %s21, 0
    %p168 = por %p166, %p167
    %s170 = sadd.s32 %s169, 1
    %p173 = scmp.eq.s32.totalorder %s15, 1
    %p174 = scmp.ne.s32.totalorder %s169, %s171
    %p175 = scmp.eq.s32.totalorder %s15, 0
    %p176 = por %p174, %p175
    %p177 = scmp.ne.s32.totalorder %s169, %s171
    %p178 = scmp.eq.s32.totalorder %s20, 1
    %p179 = por %p177, %p178
    %p180 = scmp.ne.s32.totalorder %s171, %s172
    %p181 = scmp.eq.s32.totalorder %s20, 0
    %p182 = por %p180, %p181
    %p183 = scmp.ne.s32.totalorder %s171, %s172
    %p184 = scmp.eq.s32.totalorder %s21, 1
    %p185 = por %p183, %p184
    %p187 = scmp.ne.s32.totalorder %s172, %s186
    %p188 = scmp.eq.s32.totalorder %s21, 0
    %p189 = por %p187, %p188
    %s191 = sadd.s32 %s190, 1
    %p194 = scmp.eq.s32.totalorder %s15, 1
    %p195 = scmp.ne.s32.totalorder %s190, %s192
    %p196 = scmp.eq.s32.totalorder %s15, 0
    %p197 = por %p195, %p196
    %p198 = scmp.ne.s32.totalorder %s190, %s192
    %p199 = scmp.eq.s32.totalorder %s20, 1
    %p200 = por %p198, %p199
    %p201 = scmp.ne.s32.totalorder %s192, %s193
    %p202 = scmp.eq.s32.totalorder %s20, 0
    %p203 = por %p201, %p202
    %p204 = scmp.ne.s32.totalorder %s192, %s193
    %p205 = scmp.eq.s32.totalorder %s21, 1
    %p206 = por %p204, %p205
    %p208 = scmp.ne.s32.totalorder %s193, %s207
    %p209 = scmp.eq.s32.totalorder %s21, 0
    %p210 = por %p208, %p209
    %s211 = ssub.s32 %s23, %s37
    %p212 = scmp.eq.s32.totalorder %s211, 0
    %s214 = sadd.s32 %s213, 1
    %s215 = scalar_select %p212, %s213, %s214
    %p218 = pneg %p212
    %p219 = scmp.eq.s32.totalorder %s15, 1
    %p220 = por %p218, %p219
    %p221 = scmp.ne.s32.totalorder %s213, %s216
    %p222 = scmp.eq.s32.totalorder %s15, 0
    %p223 = por %p221, %p222
    %p224 = scmp.ne.s32.totalorder %s213, %s216
    %p225 = scmp.eq.s32.totalorder %s20, 1
    %p226 = por %p224, %p225
    %p227 = scmp.ne.s32.totalorder %s216, %s217
    %p228 = scmp.eq.s32.totalorder %s20, 0
    %p229 = por %p227, %p228
    %p230 = scmp.ne.s32.totalorder %s216, %s217
    %p231 = scmp.eq.s32.totalorder %s21, 1
    %p232 = por %p230, %p231
    %p234 = scmp.ne.s32.totalorder %s217, %s233
    %p235 = scmp.eq.s32.totalorder %s21, 0
    %p236 = por %p234, %p235
    %p237 = scmp.le.s32.totalorder 1, %s15
    %p238 = scmp.lt.s32.totalorder %s15, 3
    %p239 = pnand %p237, %p238
    %p240 = pneg %p239
    // Predicated region
    $region9: #{sigl_forward.2} parent=5 // pred_check
      _
    $region10: #{sigl_forward.2} parent=5 // pred_check_branch
      %242 = sbr.rel (%p239) target = $region12
    $region11: #{sigl_forward.2} parent=5 // pred_region
      %s243 = ssub.s32 %s15, 1
      // Predicated region
      $region13: #{sigl_forward.2} parent=11 // pred_check
        %p244 = pneg %p62
      $region14: #{sigl_forward.2} parent=11 // pred_check_branch
        %246 = sbr.rel (%p244) target = $region16
      $region15: #{sigl_forward.2} parent=11 // pred_region
        %s247 = smul.u32 2, %s26
        %p248 = scmp.lt.s32.totalorder %s247, 1
        %s249 = scalar_select %p248, %s247, 1
        %p250 = scmp.lt.s32.totalorder %s27, 0
        %s251 = scalar_select %p250, %s27, 0
        %s252 = sadd.s32 %s251, %s249
        %s253 = smul.addr %s252, 8
        %s254 = scalar_lea.vmem %s0, %s253
        %s255 = smul.u32 2, %s26
      $region16: #{sigl_forward.2} parent=11 // pred_fallthru
        _
      // Predicated region
      $region17: #{sigl_forward.2} parent=11 // pred_check
        %p256 = pneg %p88
      $region18: #{sigl_forward.2} parent=11 // pred_check_branch
        %258 = sbr.rel (%p256) target = $region20
      $region19: #{sigl_forward.2} parent=11 // pred_region
        %s259 = smul.u32 2, %s26
        %p260 = scmp.lt.s32.totalorder %s259, 1
        %s261 = scalar_select %p260, %s259, 1
        %s262 = smul.addr %s261, 8
        %s263 = scalar_lea.vmem %s1, %s262
        %s264 = smul.u32 2, %s26
      $region20: #{sigl_forward.2} parent=11 // pred_fallthru
        _
      // Predicated region
      $region21: #{sigl_forward.2} parent=11 // pred_check
        %p265 = pneg %p114
      $region22: #{sigl_forward.2} parent=11 // pred_check_branch
        %267 = sbr.rel (%p265) target = $region24
      $region23: #{sigl_forward.2} parent=11 // pred_region
        %p268 = scmp.lt.s32.totalorder %s27, 0
        %s269 = scalar_select %p268, %s27, 0
        %s270 = scalar_lea.vmem %s2, %s269
      $region24: #{sigl_forward.2} parent=11 // pred_fallthru
        _
      // Predicated region
      $region25: #{sigl_forward.2} parent=11 // pred_check
        %p271 = pneg %p140
      $region26: #{sigl_forward.2} parent=11 // pred_check_branch
        %273 = sbr.rel (%p271) target = $region28
      $region27: #{sigl_forward.2} parent=11 // pred_region
        %s274 = smul.u32 2, %s27
        %p275 = scmp.lt.s32.totalorder %s274, 1
        %s276 = scalar_select %p275, %s274, 1
        %s277 = smul.addr %s276, 8
        %s278 = scalar_lea.vmem %s3, %s277
        %s279 = smul.u32 2, %s27
      $region28: #{sigl_forward.2} parent=11 // pred_fallthru
        _
      // Predicated region
      $region29: #{sigl_forward.2} parent=11 // pred_check
        %p280 = pneg %p161
      $region30: #{sigl_forward.2} parent=11 // pred_check_branch
        %282 = sbr.rel (%p280) target = $region32
      $region31: #{sigl_forward.2} parent=11 // pred_region
        _
      $region32: #{sigl_forward.2} parent=11 // pred_fallthru
        _
      // Predicated region
      $region33: #{sigl_forward.2} parent=11 // pred_check
        %p283 = pneg %p182
      $region34: #{sigl_forward.2} parent=11 // pred_check_branch
        %285 = sbr.rel (%p283) target = $region36
      $region35: #{sigl_forward.2} parent=11 // pred_region
        _
      $region36: #{sigl_forward.2} parent=11 // pred_fallthru
        _
      // Predicated region
      $region37: #{sigl_forward.2} parent=11 // pred_check
        %p286 = pneg %p203
      $region38: #{sigl_forward.2} parent=11 // pred_check_branch
        %288 = sbr.rel (%p286) target = $region40
      $region39: #{sigl_forward.2} parent=11 // pred_region
        _
      $region40: #{sigl_forward.2} parent=11 // pred_fallthru
        _
    $region12: #{sigl_forward.2} parent=5 // pred_fallthru
      _
    %p289 = scmp.lt.s32.totalorder %s15, 2
    // Predicated region
    $region41: #{sigl_forward.2} parent=5 // pred_check
      %p290 = pneg %p289
    $region42: #{sigl_forward.2} parent=5 // pred_check_branch
      %292 = sbr.rel (%p290) target = $region44
    $region43: #{sigl_forward.2} parent=5 // pred_region
      _
    $region44: #{sigl_forward.2} parent=5 // pred_fallthru
      _
    %p293 = scmp.le.s32.totalorder 1, %s15
    %p294 = scmp.lt.s32.totalorder %s15, 3
    %p295 = pnand %p293, %p294
    %p296 = pneg %p295
    // Predicated region
    $region45: #{sigl_forward.2} parent=5 // pred_check
      _
    $region46: #{sigl_forward.2} parent=5 // pred_check_branch
      %298 = sbr.rel (%p295) target = $region48
    $region47: #{sigl_forward.2} parent=5 // pred_region
      %s299 = ssub.s32 %s15, 1
      %s300 = smul.u32 2, %s26
      %p301 = scmp.lt.s32.totalorder %s300, 1
      %s302 = scalar_select %p301, %s300, 1
      %p303 = scmp.lt.s32.totalorder %s27, 0
      %s304 = scalar_select %p303, %s27, 0
      %s305 = sadd.s32 %s304, %s302
      %s306 = smul.addr %s305, 8
      %s307 = scalar_lea.vmem %s0, %s306
      %p308 = pneg %p62
      %p309 = pneg %p59
      %s310 = smul.u32 2, %s26
      %p311 = scmp.lt.s32.totalorder %s310, 1
      %s312 = scalar_select %p311, %s310, 1
      %s313 = smul.addr %s312, 8
      %s314 = scalar_lea.vmem %s1, %s313
      %p315 = pneg %p88
      %p316 = pneg %p85
      %p317 = scmp.lt.s32.totalorder %s27, 0
      %s318 = scalar_select %p317, %s27, 0
      %s319 = scalar_lea.vmem %s2, %s318
      %p320 = pneg %p114
      %p321 = pneg %p111
      %s322 = smul.u32 2, %s27
      %p323 = scmp.lt.s32.totalorder %s322, 1
      %s324 = scalar_select %p323, %s322, 1
      %s325 = smul.addr %s324, 8
      %s326 = scalar_lea.vmem %s3, %s325
      %p327 = pneg %p140
      %p328 = pneg %p137
      %p329 = pneg %p161
      %p330 = pneg %p158
      %p331 = pneg %p182
      %p332 = pneg %p179
      %p333 = pneg %p203
      %p334 = pneg %p200
      %p335 = pneg %p229
      %p336 = pneg %p226
      %s337 = smul.u32 2, %s26
      %p338 = scmp.lt.s32.totalorder %s337, 1
      %s339 = scalar_select %p338, %s337, 1
      %s340 = smul.addr %s339, 8
      %s341 = scalar_lea.vmem %s7, %s340
      %s342 = smul.u32 2, %s26
      %p343 = scmp.lt.s32.totalorder %s342, 1
      %s344 = scalar_select %p343, %s342, 1
      %p345 = scmp.lt.s32.totalorder %s27, 0
      %s346 = scalar_select %p345, %s27, 0
      %s347 = sadd.s32 %s346, %s344
      %s348 = smul.addr %s347, 8
      %s349 = scalar_lea.vmem %s0, %s348
      %s350 = smul.u32 2, %s26
      %s351 = smul.u32 2, %s26
      %p352 = scmp.lt.s32.totalorder %s351, 1
      %s353 = scalar_select %p352, %s351, 1
      %s354 = smul.addr %s353, 8
      %s355 = scalar_lea.vmem %s1, %s354
      %s356 = smul.u32 2, %s26
      %p357 = scmp.lt.s32.totalorder %s27, 0
      %s358 = scalar_select %p357, %s27, 0
      %s359 = scalar_lea.vmem %s2, %s358
      %s360 = smul.u32 2, %s27
      %p361 = scmp.lt.s32.totalorder %s360, 1
      %s362 = scalar_select %p361, %s360, 1
      %s363 = smul.addr %s362, 8
      %s364 = scalar_lea.vmem %s3, %s363
      %s365 = smul.u32 2, %s27
      %s366 = smul.u32 2, %s26
      %p367 = scmp.lt.s32.totalorder %s366, 1
      %s368 = scalar_select %p367, %s366, 1
      %s369 = smul.addr %s368, 8
      %s370 = scalar_lea.vmem %s7, %s369
      %s371 = smul.u32 2, %s26
      %v372 = vld [vmem:[%s349] sm:$0xff]
      %v373 = vld [vmem:[%s349 + $0x8] sm:$0xff]
      %v374 = vld [vmem:[%s355] sm:$0xff]
      %v375 = vld [vmem:[%s355 + $0x8] sm:$0xff]
      %377 = vset.pattern.permute.xlu0 0
      %378 = vperm.xlu0 %377, %v374
      %v379 = vpop.permute.xlu0 %378
      %382 = vset.pattern.permute.xlu0 0
      %383 = vperm.xlu0 %382, %v375
      %v384 = vpop.permute.xlu0 %383
      %v386 = vmul.f32 %v372, %v379
      %v387 = vmul.f32 %v373, %v384
      %v388 = vld [vmem:[%s359] sm:$0x1]
      %v390 = vperm.slane %v388, 0
      %v392 = vmul.f32 %v386, %v390
      %v393 = vmul.f32 %v387, %v390
      %p394 = scmp.eq.s32.totalorder %s25, 0
      %p395 = scmp.eq.s32.totalorder %s27, 0
      %p396 = pnand %p394, %p395
      %p397 = pneg %p396
      // Predicated region
      $region49: #{sigl_forward.2} parent=47 // pred_check
        _
      $region50: #{sigl_forward.2} parent=47 // pred_check_branch
        %399 = sbr.rel (%p396) target = $region52
      $region51: #{sigl_forward.2} parent=47 // pred_region
        %vm400 = vcmask 261120
        %401 = vst.msk [vmem:[#allocation2] sm:$0xff] %vm400, 0.0
        %402 = vst.msk [vmem:[#allocation2 + $0x8] sm:$0xff] %vm400, 0.0
      $region52: #{sigl_forward.2} parent=47 // pred_fallthru
        _
      // Predicated region
      $region53: #{sigl_forward.2} parent=47 // pred_check
        %p403 = pneg %p394
      $region54: #{sigl_forward.2} parent=47 // pred_check_branch
        %405 = sbr.rel (%p403) target = $region56
      $region55: #{sigl_forward.2} parent=47 // pred_region
        %v406 = vld [vmem:[#allocation2] sm:$0xff]
        %v407 = vld [vmem:[#allocation2 + $0x8] sm:$0xff]
        %v408 = vld [vmem:[%s364] sm:$0xff]
        %v409 = vld [vmem:[%s364 + $0x8] sm:$0xff]
        %vm410 = vcmask 130048
        %v412 = vsel %vm410, %v392, 0
        %v415 = vsel %vm410, %v393, 0
        %417 = vmatpush.msra.mxu0 0.0
        %418 = vmatpush.msra.mxu0 0.0
        %419 = vmatpush.msra.mxu0 0.0
        %420 = vmatpush.msra.mxu0 0.0
        %421 = vmatpush.msra.mxu0 0.0
        %422 = vmatpush.msra.mxu0 0.0
        %423 = vmatpush.msra.mxu0 0.0
        %424 = vmatpush.msra.mxu0 0.0
        %425 = vmatpush.msra.mxu0 0.0
        %426 = vmatpush.msra.mxu0 0.0
        %427 = vmatpush.msra.mxu0 0.0
        %428 = vmatpush.msra.mxu0 0.0
        %429 = vmatpush.msra.mxu0 0.0
        %430 = vmatpush.msra.mxu0 0.0
        %431 = vmatpush.msra.mxu0 %v409
        %432 = vmatpush.msra.mxu0 %v408
        %433 = vmatmul.f32.gmra.mxu0 %v412
        %v434 = vpop.f32.mrf.mxu0
        %v435 = vadd.f32 0.0, %v434
        %436 = vmatmul.f32.gmra.mxu0 %v415
        %v437 = vpop.f32.mrf.mxu0
        %v438 = vadd.f32 0.0, %v437
        %439 = vdwg.mxu0
        %v440 = vadd.f32 %v406, %v435
        %v441 = vadd.f32 %v407, %v438
        %vm442 = vcmask 261120
        %443 = vst.msk [vmem:[#allocation2] sm:$0xff] %vm442, %v440
        %444 = vst.msk [vmem:[#allocation2 + $0x8] sm:$0xff] %vm442, %v441
      $region56: #{sigl_forward.2} parent=47 // pred_fallthru
        _
      // Predicated region
      $region57: #{sigl_forward.2} parent=47 // pred_check
        _
      $region58: #{sigl_forward.2} parent=47 // pred_check_branch
        %446 = sbr.rel (%p396) target = $region60
      $region59: #{sigl_forward.2} parent=47 // pred_region
        %v447 = vld [vmem:[#allocation2] sm:$0xff]
        %v448 = vld [vmem:[#allocation2 + $0x8] sm:$0xff]
        %v449 = vld [vmem:[%s4] sm:$0x1]
        %v451 = vperm.slane %v449, 0
        %v453 = vadd.f32 %v447, %v451
        %v454 = vadd.f32 %v448, %v451
        %v455 = vmax.f32 %v453, 0.0
        %v456 = vmax.f32 %v454, 0.0
        %s457 = smul.u32 %s26, 16
        %v458 = vld [vmem:[%s5] sm:$0xff]
        %v459 = vld [vmem:[%s5 + $0x8] sm:$0xff]
        %v460 = vld [vmem:[%s5 + $0x10] sm:$0xff]
        %v461 = vld [vmem:[%s5 + $0x18] sm:$0xff]
        %vm462 = vcmask 261120
        %v464 = vsel %vm462, %v455, 0
        %v467 = vsel %vm462, %v456, 0
        %469 = vmatpush.msra.mxu0 0.0
        %470 = vmatpush.msra.mxu0 0.0
        %471 = vmatpush.msra.mxu0 0.0
        %472 = vmatpush.msra.mxu0 0.0
        %473 = vmatpush.msra.mxu0 0.0
        %474 = vmatpush.msra.mxu0 0.0
        %475 = vmatpush.msra.mxu0 0.0
        %476 = vmatpush.msra.mxu0 0.0
        %477 = vmatpush.msra.mxu0 0.0
        %478 = vmatpush.msra.mxu0 0.0
        %479 = vmatpush.msra.mxu0 0.0
        %480 = vmatpush.msra.mxu0 0.0
        %481 = vmatpush.msra.mxu0 %v461
        %482 = vmatpush.msra.mxu0 %v460
        %483 = vmatpush.msra.mxu0 %v459
        %484 = vmatpush.msra.mxu0 %v458
        %485 = vmatmul.f32.gmra.mxu0 %v464
        %v486 = vpop.f32.mrf.mxu0
        %v487 = vadd.f32 0.0, %v486
        %488 = vmatmul.f32.gmra.mxu0 %v467
        %v489 = vpop.f32.mrf.mxu0
        %v490 = vadd.f32 0.0, %v489
        %491 = vdwg.mxu0
        %s492 = scalar_lea.vmem [#allocation4], %s457
        %vm493 = vcmask 7168
        %494 = vst.msk [vmem:[%s492] sm:$0xff] %vm493, %v487
        %495 = vst.msk [vmem:[%s492 + $0x8] sm:$0xff] %vm493, %v490
        %496 = vst.msk [vmem:[%s370] sm:$0xff] %vm493, 0.0
        %497 = vst.msk [vmem:[%s370 + $0x8] sm:$0xff] %vm493, 0.0
      $region60: #{sigl_forward.2} parent=47 // pred_fallthru
        _
      %p498 = scmp.eq.s32.totalorder %s25, 1
      %p499 = pnand %p498, %p395
      %p500 = pneg %p499
      // Predicated region
      $region61: #{sigl_forward.2} parent=47 // pred_check
        _
      $region62: #{sigl_forward.2} parent=47 // pred_check_branch
        %502 = sbr.rel (%p499) target = $region64
      $region63: #{sigl_forward.2} parent=47 // pred_region
        %vm503 = vcmask 7168
        %504 = vst.msk [vmem:[#allocation3] sm:$0xff] %vm503, 0.0
        %505 = vst.msk [vmem:[#allocation3 + $0x8] sm:$0xff] %vm503, 0.0
      $region64: #{sigl_forward.2} parent=47 // pred_fallthru
        _
      // Predicated region
      $region65: #{sigl_forward.2} parent=47 // pred_check
        %p506 = pneg %p498
      $region66: #{sigl_forward.2} parent=47 // pred_check_branch
        %508 = sbr.rel (%p506) target = $region68
      $region67: #{sigl_forward.2} parent=47 // pred_region
        %s509 = smul.u32 %s27, 16
        %s510 = scalar_lea.vmem [#allocation4], %s509
        %v511 = vld [vmem:[%s510] sm:$0xff]
        %v512 = vld [vmem:[%s510 + $0x8] sm:$0xff]
        %v513 = vld [vmem:[#allocation3] sm:$0xff]
        %v514 = vld [vmem:[#allocation3 + $0x8] sm:$0xff]
        %vm515 = vcmask 130048
        %v517 = vsel %vm515, %v392, 0
        %v520 = vsel %vm515, %v393, 0
        %522 = vmatpush.msra.mxu0 0.0
        %523 = vmatpush.msra.mxu0 0.0
        %524 = vmatpush.msra.mxu0 0.0
        %525 = vmatpush.msra.mxu0 0.0
        %526 = vmatpush.msra.mxu0 0.0
        %527 = vmatpush.msra.mxu0 0.0
        %528 = vmatpush.msra.mxu0 0.0
        %529 = vmatpush.msra.mxu0 0.0
        %530 = vmatpush.msra.mxu0 0.0
        %531 = vmatpush.msra.mxu0 0.0
        %532 = vmatpush.msra.mxu0 0.0
        %533 = vmatpush.msra.mxu0 0.0
        %534 = vmatpush.msra.mxu0 0.0
        %535 = vmatpush.msra.mxu0 0.0
        %536 = vmatpush.msra.mxu0 %v512
        %537 = vmatpush.msra.mxu0 %v511
        %538 = vmatmul.f32.gmra.mxu0 %v517
        %v539 = vpop.f32.mrf.mxu0
        %v540 = vadd.f32 0.0, %v539
        %541 = vmatmul.f32.gmra.mxu0 %v520
        %v542 = vpop.f32.mrf.mxu0
        %v543 = vadd.f32 0.0, %v542
        %544 = vdwg.mxu0
        %v545 = vadd.f32 %v513, %v540
        %v546 = vadd.f32 %v514, %v543
        %vm547 = vcmask 7168
        %548 = vst.msk [vmem:[#allocation3] sm:$0xff] %vm547, %v545
        %549 = vst.msk [vmem:[#allocation3 + $0x8] sm:$0xff] %vm547, %v546
      $region68: #{sigl_forward.2} parent=47 // pred_fallthru
        _
      // Predicated region
      $region69: #{sigl_forward.2} parent=47 // pred_check
        _
      $region70: #{sigl_forward.2} parent=47 // pred_check_branch
        %551 = sbr.rel (%p499) target = $region72
      $region71: #{sigl_forward.2} parent=47 // pred_region
        %v552 = vld [vmem:[#allocation3] sm:$0xff]
        %v553 = vld [vmem:[#allocation3 + $0x8] sm:$0xff]
        %v554 = vld [vmem:[#allocation5] sm:$0x1]
        %v556 = vperm.slane %v554, 0
        %v558 = vadd.f32 %v552, %v556
        %v559 = vadd.f32 %v553, %v556
        %vm560 = vcmask 7168
        %561 = vst.msk [vmem:[%s370] sm:$0xff] %vm560, %v558
        %562 = vst.msk [vmem:[%s370 + $0x8] sm:$0xff] %vm560, %v559
      $region72: #{sigl_forward.2} parent=47 // pred_fallthru
        _
      %s563 = smul.u32 2, %s26
      %p564 = scmp.lt.s32.totalorder %s563, 1
      %s565 = scalar_select %p564, %s563, 1
      %s566 = smul.addr %s565, 8
      %s567 = scalar_lea.vmem %s7, %s566
      // Predicated region
      $region73: #{sigl_forward.2} parent=47 // pred_check
        %p568 = pneg %p226
      $region74: #{sigl_forward.2} parent=47 // pred_check_branch
        %570 = sbr.rel (%p568) target = $region76
      $region75: #{sigl_forward.2} parent=47 // pred_region
        %s571 = smul.u32 2, %s26
      $region76: #{sigl_forward.2} parent=47 // pred_fallthru
        _
      // Predicated region
      $region77: #{sigl_forward.2} parent=47 // pred_check
        %p572 = pneg %p226
      $region78: #{sigl_forward.2} parent=47 // pred_check_branch
        %574 = sbr.rel (%p572) target = $region80
      $region79: #{sigl_forward.2} parent=47 // pred_region
        %s575 = smul.u32 2, %s26
        %p576 = scmp.lt.s32.totalorder %s575, 1
        %s577 = scalar_select %p576, %s575, 1
        %s578 = smul.addr %s577, 8
        %s579 = scalar_lea.vmem %s7, %s578
      $region80: #{sigl_forward.2} parent=47 // pred_fallthru
        _
    $region48: #{sigl_forward.2} parent=5 // pred_fallthru
      _
    %p580 = scmp.le.s32.totalorder 2, %s15
    // Predicated region
    $region81: #{sigl_forward.2} parent=5 // pred_check
      %p581 = pneg %p580
    $region82: #{sigl_forward.2} parent=5 // pred_check_branch
      %583 = sbr.rel (%p581) target = $region84
    $region83: #{sigl_forward.2} parent=5 // pred_region
      %s584 = ssub.s32 %s15, 2
    $region84: #{sigl_forward.2} parent=5 // pred_fallthru
      _
  $region6: #{sigl_forward.2} parent=0 // loop_footer
    %s19 = sadd.s32 1, %s15
  $region7: #{sigl_forward.2} parent=0 // loop_footer_branch
    %14 = sbr.rel target = $region3
  $region8: #{sigl_forward.2} parent=0 // loop_exit
    _

// kernel: sigl_forward.3
$region0: #{sigl_forward.3}
  #allocation0 [shape = 'u32[]', space=smem, size = 0x4, offset = 0x4, fixed_abs, tag = 'smem constant byte address 0x4 - core index']
  #allocation1 [shape = 'u32[72,128]{1,0:T(1,128)}', space=vmem, size = 0x9000, scoped, tag = 'internal scratch']
  #allocation2 [shape = 'f32[1,1]{1,0:T(1,128)S(1)}', space=vmem, size = 0x200, scoped, tag = 'scoped memory for sigl_forward.3']
  %s0 = inlined_call_operand.vmem [shape: f32[16,1], index: 0, kind: input, shape index: {}]
  %s1 = inlined_call_operand.vmem [shape: f32[1,16], index: 1, kind: input, shape index: {}]
  %s2 = inlined_call_operand.vmem [shape: f32[32,1], index: 2, kind: input, shape index: {}]
  %s3 = inlined_call_operand.vmem [shape: f32[32,1], index: 3, kind: input, shape index: {}]
  %s4 = inlined_call_operand.vmem [shape: f32[32,1], index: 4, kind: input, shape index: {}]
  %s5 = inlined_call_operand.vmem [shape: f32[32,32], index: 5, kind: input, shape index: {}]
  %s6 = inlined_call_operand.vmem [shape: f32[32,1], index: 6, kind: input, shape index: {}]
  %s7 = inlined_call_operand.vmem [shape: f32[1,32], index: 7, kind: input, shape index: {}]
  %s8 = inlined_call_operand.<no memory space> [shape: f32[1,1], index: 8, kind: input, shape index: {}]
  %s9 = inlined_call_operand.vmem [shape: f32[16,16], index: 9, kind: output, shape index: {}]
  %s10 = sld [smem:[#allocation0]]
  $region69: #{sigl_forward.3} parent=0
    _
  %s12 = ssub.s32 1, %s10
  %s13 = scalar_select 0, %s12, %s10
  %v14 = vstv %s8
  %15 = vst [vmem:[#allocation2] sm:$0x1] %v14
  loop: start=0, step=1, limit=4
  $region2: #{sigl_forward.3} parent=0 // loop_pre_header
    _
  $region3: #{sigl_forward.3} parent=0 // loop_header
    %s17 = sphi 0, %s21
    %p18 = scmp.ge.s32.totalorder %s17, 4
    %s24 = sphi 0, %s36
    %s25 = sphi 0, %s32
    %s26 = sphi 0, %s24
    %s27 = sphi 0, %s25
    %s28 = sphi 0, %s26
    %s29 = sphi 0, %s27
    %s39 = sphi 0, %s41
    %s42 = sphi 0, %s39
    %s43 = sphi 0, %s42
    %s59 = sphi 0, %s43
    %s65 = sphi 0, %s67
    %s68 = sphi 0, %s65
    %s69 = sphi 0, %s68
    %s85 = sphi 0, %s69
    %s89 = sphi 0, %s89
    %s91 = sphi 0, %s89
    %s92 = sphi 0, %s91
    %s106 = sphi 0, %s92
    %s110 = sphi 0, %s110
    %s112 = sphi 0, %s110
    %s113 = sphi 0, %s112
    %s127 = sphi 0, %s113
    %s131 = sphi 0, %s131
    %s133 = sphi 0, %s131
    %s134 = sphi 0, %s133
    %s148 = sphi 0, %s134
    %s152 = sphi 0, %s152
    %s154 = sphi 0, %s152
    %s155 = sphi 0, %s154
    %s169 = sphi 0, %s155
    %s173 = sphi 0, %s173
    %s175 = sphi 0, %s173
    %s176 = sphi 0, %s175
    %s190 = sphi 0, %s176
    %s194 = sphi 0, %s194
    %s196 = sphi 0, %s194
    %s197 = sphi 0, %s196
    %s211 = sphi 0, %s197
    %s215 = sphi 0, %s215
    %s217 = sphi 0, %s215
    %s218 = sphi 0, %s217
    %s232 = sphi 0, %s218
    %s240 = sphi 0, %s242
    %s243 = sphi 0, %s240
    %s244 = sphi 0, %s243
    %s260 = sphi 0, %s244
  $region4: #{sigl_forward.3} parent=0 // loop_header_branch
    %20 = sbr.rel (%p18) target = $region8
  $region5: #{sigl_forward.3} parent=0 // loop_body
    %s22 = ssub.s32 %s17, 1
    %s23 = ssub.s32 %s17, 2
    %s30 = sadd.s32 1, %s25
    %p31 = scmp.ge.s32.totalorder %s30, 1
    %s32 = scalar_select %p31, 0, %s30
    %s33 = sadd.s32 1, %s24
    %s34 = scalar_select %p31, %s33, %s24
    %p35 = scmp.ge.s32.totalorder %s34, 2
    %s36 = scalar_select %p35, 0, %s34
    %s37 = ssub.s32 %s24, %s36
    %p38 = scmp.eq.s32.totalorder %s37, 0
    %s40 = sadd.s32 %s39, 1
    %s41 = scalar_select %p38, %s39, %s40
    %p44 = pneg %p38
    %p45 = scmp.eq.s32.totalorder %s17, 1
    %p46 = por %p44, %p45
    %p47 = scmp.ne.s32.totalorder %s39, %s42
    %p48 = scmp.eq.s32.totalorder %s17, 0
    %p49 = por %p47, %p48
    %p50 = scmp.ne.s32.totalorder %s39, %s42
    %p51 = scmp.eq.s32.totalorder %s22, 1
    %p52 = por %p50, %p51
    %p53 = scmp.ne.s32.totalorder %s42, %s43
    %p54 = scmp.eq.s32.totalorder %s22, 0
    %p55 = por %p53, %p54
    %p56 = scmp.ne.s32.totalorder %s42, %s43
    %p57 = scmp.eq.s32.totalorder %s23, 1
    %p58 = por %p56, %p57
    %p60 = scmp.ne.s32.totalorder %s43, %s59
    %p61 = scmp.eq.s32.totalorder %s23, 0
    %p62 = por %p60, %p61
    %s63 = ssub.s32 %s25, %s32
    %p64 = scmp.eq.s32.totalorder %s63, 0
    %s66 = sadd.s32 %s65, 1
    %s67 = scalar_select %p64, %s65, %s66
    %p70 = pneg %p64
    %p71 = scmp.eq.s32.totalorder %s17, 1
    %p72 = por %p70, %p71
    %p73 = scmp.ne.s32.totalorder %s65, %s68
    %p74 = scmp.eq.s32.totalorder %s17, 0
    %p75 = por %p73, %p74
    %p76 = scmp.ne.s32.totalorder %s65, %s68
    %p77 = scmp.eq.s32.totalorder %s22, 1
    %p78 = por %p76, %p77
    %p79 = scmp.ne.s32.totalorder %s68, %s69
    %p80 = scmp.eq.s32.totalorder %s22, 0
    %p81 = por %p79, %p80
    %p82 = scmp.ne.s32.totalorder %s68, %s69
    %p83 = scmp.eq.s32.totalorder %s23, 1
    %p84 = por %p82, %p83
    %p86 = scmp.ne.s32.totalorder %s69, %s85
    %p87 = scmp.eq.s32.totalorder %s23, 0
    %p88 = por %p86, %p87
    %s90 = sadd.s32 %s89, 1
    %p93 = scmp.eq.s32.totalorder %s17, 1
    %p94 = scmp.ne.s32.totalorder %s89, %s91
    %p95 = scmp.eq.s32.totalorder %s17, 0
    %p96 = por %p94, %p95
    %p97 = scmp.ne.s32.totalorder %s89, %s91
    %p98 = scmp.eq.s32.totalorder %s22, 1
    %p99 = por %p97, %p98
    %p100 = scmp.ne.s32.totalorder %s91, %s92
    %p101 = scmp.eq.s32.totalorder %s22, 0
    %p102 = por %p100, %p101
    %p103 = scmp.ne.s32.totalorder %s91, %s92
    %p104 = scmp.eq.s32.totalorder %s23, 1
    %p105 = por %p103, %p104
    %p107 = scmp.ne.s32.totalorder %s92, %s106
    %p108 = scmp.eq.s32.totalorder %s23, 0
    %p109 = por %p107, %p108
    %s111 = sadd.s32 %s110, 1
    %p114 = scmp.eq.s32.totalorder %s17, 1
    %p115 = scmp.ne.s32.totalorder %s110, %s112
    %p116 = scmp.eq.s32.totalorder %s17, 0
    %p117 = por %p115, %p116
    %p118 = scmp.ne.s32.totalorder %s110, %s112
    %p119 = scmp.eq.s32.totalorder %s22, 1
    %p120 = por %p118, %p119
    %p121 = scmp.ne.s32.totalorder %s112, %s113
    %p122 = scmp.eq.s32.totalorder %s22, 0
    %p123 = por %p121, %p122
    %p124 = scmp.ne.s32.totalorder %s112, %s113
    %p125 = scmp.eq.s32.totalorder %s23, 1
    %p126 = por %p124, %p125
    %p128 = scmp.ne.s32.totalorder %s113, %s127
    %p129 = scmp.eq.s32.totalorder %s23, 0
    %p130 = por %p128, %p129
    %s132 = sadd.s32 %s131, 1
    %p135 = scmp.eq.s32.totalorder %s17, 1
    %p136 = scmp.ne.s32.totalorder %s131, %s133
    %p137 = scmp.eq.s32.totalorder %s17, 0
    %p138 = por %p136, %p137
    %p139 = scmp.ne.s32.totalorder %s131, %s133
    %p140 = scmp.eq.s32.totalorder %s22, 1
    %p141 = por %p139, %p140
    %p142 = scmp.ne.s32.totalorder %s133, %s134
    %p143 = scmp.eq.s32.totalorder %s22, 0
    %p144 = por %p142, %p143
    %p145 = scmp.ne.s32.totalorder %s133, %s134
    %p146 = scmp.eq.s32.totalorder %s23, 1
    %p147 = por %p145, %p146
    %p149 = scmp.ne.s32.totalorder %s134, %s148
    %p150 = scmp.eq.s32.totalorder %s23, 0
    %p151 = por %p149, %p150
    %s153 = sadd.s32 %s152, 1
    %p156 = scmp.eq.s32.totalorder %s17, 1
    %p157 = scmp.ne.s32.totalorder %s152, %s154
    %p158 = scmp.eq.s32.totalorder %s17, 0
    %p159 = por %p157, %p158
    %p160 = scmp.ne.s32.totalorder %s152, %s154
    %p161 = scmp.eq.s32.totalorder %s22, 1
    %p162 = por %p160, %p161
    %p163 = scmp.ne.s32.totalorder %s154, %s155
    %p164 = scmp.eq.s32.totalorder %s22, 0
    %p165 = por %p163, %p164
    %p166 = scmp.ne.s32.totalorder %s154, %s155
    %p167 = scmp.eq.s32.totalorder %s23, 1
    %p168 = por %p166, %p167
    %p170 = scmp.ne.s32.totalorder %s155, %s169
    %p171 = scmp.eq.s32.totalorder %s23, 0
    %p172 = por %p170, %p171
    %s174 = sadd.s32 %s173, 1
    %p177 = scmp.eq.s32.totalorder %s17, 1
    %p178 = scmp.ne.s32.totalorder %s173, %s175
    %p179 = scmp.eq.s32.totalorder %s17, 0
    %p180 = por %p178, %p179
    %p181 = scmp.ne.s32.totalorder %s173, %s175
    %p182 = scmp.eq.s32.totalorder %s22, 1
    %p183 = por %p181, %p182
    %p184 = scmp.ne.s32.totalorder %s175, %s176
    %p185 = scmp.eq.s32.totalorder %s22, 0
    %p186 = por %p184, %p185
    %p187 = scmp.ne.s32.totalorder %s175, %s176
    %p188 = scmp.eq.s32.totalorder %s23, 1
    %p189 = por %p187, %p188
    %p191 = scmp.ne.s32.totalorder %s176, %s190
    %p192 = scmp.eq.s32.totalorder %s23, 0
    %p193 = por %p191, %p192
    %s195 = sadd.s32 %s194, 1
    %p198 = scmp.eq.s32.totalorder %s17, 1
    %p199 = scmp.ne.s32.totalorder %s194, %s196
    %p200 = scmp.eq.s32.totalorder %s17, 0
    %p201 = por %p199, %p200
    %p202 = scmp.ne.s32.totalorder %s194, %s196
    %p203 = scmp.eq.s32.totalorder %s22, 1
    %p204 = por %p202, %p203
    %p205 = scmp.ne.s32.totalorder %s196, %s197
    %p206 = scmp.eq.s32.totalorder %s22, 0
    %p207 = por %p205, %p206
    %p208 = scmp.ne.s32.totalorder %s196, %s197
    %p209 = scmp.eq.s32.totalorder %s23, 1
    %p210 = por %p208, %p209
    %p212 = scmp.ne.s32.totalorder %s197, %s211
    %p213 = scmp.eq.s32.totalorder %s23, 0
    %p214 = por %p212, %p213
    %s216 = sadd.s32 %s215, 1
    %p219 = scmp.eq.s32.totalorder %s17, 1
    %p220 = scmp.ne.s32.totalorder %s215, %s217
    %p221 = scmp.eq.s32.totalorder %s17, 0
    %p222 = por %p220, %p221
    %p223 = scmp.ne.s32.totalorder %s215, %s217
    %p224 = scmp.eq.s32.totalorder %s22, 1
    %p225 = por %p223, %p224
    %p226 = scmp.ne.s32.totalorder %s217, %s218
    %p227 = scmp.eq.s32.totalorder %s22, 0
    %p228 = por %p226, %p227
    %p229 = scmp.ne.s32.totalorder %s217, %s218
    %p230 = scmp.eq.s32.totalorder %s23, 1
    %p231 = por %p229, %p230
    %p233 = scmp.ne.s32.totalorder %s218, %s232
    %p234 = scmp.eq.s32.totalorder %s23, 0
    %p235 = por %p233, %p234
    %s236 = ssub.s32 %s24, %s36
    %s237 = ssub.s32 %s25, %s32
    %s238 = sor.u32 %s236, %s237
    %p239 = scmp.eq.s32.totalorder %s238, 0
    %s241 = sadd.s32 %s240, 1
    %s242 = scalar_select %p239, %s240, %s241
    %p245 = pneg %p239
    %p246 = scmp.eq.s32.totalorder %s17, 1
    %p247 = por %p245, %p246
    %p248 = scmp.ne.s32.totalorder %s240, %s243
    %p249 = scmp.eq.s32.totalorder %s17, 0
    %p250 = por %p248, %p249
    %p251 = scmp.ne.s32.totalorder %s240, %s243
    %p252 = scmp.eq.s32.totalorder %s22, 1
    %p253 = por %p251, %p252
    %p254 = scmp.ne.s32.totalorder %s243, %s244
    %p255 = scmp.eq.s32.totalorder %s22, 0
    %p256 = por %p254, %p255
    %p257 = scmp.ne.s32.totalorder %s243, %s244
    %p258 = scmp.eq.s32.totalorder %s23, 1
    %p259 = por %p257, %p258
    %p261 = scmp.ne.s32.totalorder %s244, %s260
    %p262 = scmp.eq.s32.totalorder %s23, 0
    %p263 = por %p261, %p262
    %p264 = scmp.le.s32.totalorder 1, %s17
    %p265 = scmp.lt.s32.totalorder %s17, 3
    %p266 = pnand %p264, %p265
    %p267 = pneg %p266
    // Predicated region
    $region9: #{sigl_forward.3} parent=5 // pred_check
      _
    $region10: #{sigl_forward.3} parent=5 // pred_check_branch
      %269 = sbr.rel (%p266) target = $region12
    $region11: #{sigl_forward.3} parent=5 // pred_region
      %s270 = ssub.s32 %s17, 1
      // Predicated region
      $region13: #{sigl_forward.3} parent=11 // pred_check
        %p271 = pneg %p81
      $region14: #{sigl_forward.3} parent=11 // pred_check_branch
        %273 = sbr.rel (%p271) target = $region16
      $region15: #{sigl_forward.3} parent=11 // pred_region
        %p274 = scmp.lt.s32.totalorder %s27, 0
        %s275 = scalar_select %p274, %s27, 0
        %s276 = scalar_lea.vmem %s1, %s275
      $region16: #{sigl_forward.3} parent=11 // pred_fallthru
        _
      // Predicated region
      $region17: #{sigl_forward.3} parent=11 // pred_check
        %p277 = pneg %p102
      $region18: #{sigl_forward.3} parent=11 // pred_check_branch
        %279 = sbr.rel (%p277) target = $region20
      $region19: #{sigl_forward.3} parent=11 // pred_region
        _
      $region20: #{sigl_forward.3} parent=11 // pred_fallthru
        _
      // Predicated region
      $region21: #{sigl_forward.3} parent=11 // pred_check
        %p280 = pneg %p123
      $region22: #{sigl_forward.3} parent=11 // pred_check_branch
        %282 = sbr.rel (%p280) target = $region24
      $region23: #{sigl_forward.3} parent=11 // pred_region
        _
      $region24: #{sigl_forward.3} parent=11 // pred_fallthru
        _
      // Predicated region
      $region25: #{sigl_forward.3} parent=11 // pred_check
        %p283 = pneg %p144
      $region26: #{sigl_forward.3} parent=11 // pred_check_branch
        %285 = sbr.rel (%p283) target = $region28
      $region27: #{sigl_forward.3} parent=11 // pred_region
        _
      $region28: #{sigl_forward.3} parent=11 // pred_fallthru
        _
      // Predicated region
      $region29: #{sigl_forward.3} parent=11 // pred_check
        %p286 = pneg %p165
      $region30: #{sigl_forward.3} parent=11 // pred_check_branch
        %288 = sbr.rel (%p286) target = $region32
      $region31: #{sigl_forward.3} parent=11 // pred_region
        _
      $region32: #{sigl_forward.3} parent=11 // pred_fallthru
        _
      // Predicated region
      $region33: #{sigl_forward.3} parent=11 // pred_check
        %p289 = pneg %p186
      $region34: #{sigl_forward.3} parent=11 // pred_check_branch
        %291 = sbr.rel (%p289) target = $region36
      $region35: #{sigl_forward.3} parent=11 // pred_region
        _
      $region36: #{sigl_forward.3} parent=11 // pred_fallthru
        _
      // Predicated region
      $region37: #{sigl_forward.3} parent=11 // pred_check
        %p292 = pneg %p207
      $region38: #{sigl_forward.3} parent=11 // pred_check_branch
        %294 = sbr.rel (%p292) target = $region40
      $region39: #{sigl_forward.3} parent=11 // pred_region
        _
      $region40: #{sigl_forward.3} parent=11 // pred_fallthru
        _
      // Predicated region
      $region41: #{sigl_forward.3} parent=11 // pred_check
        %p295 = pneg %p228
      $region42: #{sigl_forward.3} parent=11 // pred_check_branch
        %297 = sbr.rel (%p295) target = $region44
      $region43: #{sigl_forward.3} parent=11 // pred_region
        _
      $region44: #{sigl_forward.3} parent=11 // pred_fallthru
        _
    $region12: #{sigl_forward.3} parent=5 // pred_fallthru
      _
    %p298 = scmp.lt.s32.totalorder %s17, 2
    // Predicated region
    $region45: #{sigl_forward.3} parent=5 // pred_check
      %p299 = pneg %p298
    $region46: #{sigl_forward.3} parent=5 // pred_check_branch
      %301 = sbr.rel (%p299) target = $region48
    $region47: #{sigl_forward.3} parent=5 // pred_region
      // Predicated region
      $region49: #{sigl_forward.3} parent=47 // pred_check
        %p302 = pneg %p49
      $region50: #{sigl_forward.3} parent=47 // pred_check_branch
        %304 = sbr.rel (%p302) target = $region52
      $region51: #{sigl_forward.3} parent=47 // pred_region
        %p305 = scmp.lt.s32.totalorder %s24, 1
        %s306 = scalar_select %p305, %s24, 1
        %s307 = smul.addr %s306, 8
        %s308 = scalar_lea.vmem %s0, %s307
      $region52: #{sigl_forward.3} parent=47 // pred_fallthru
        _
    $region48: #{sigl_forward.3} parent=5 // pred_fallthru
      _
    %p309 = scmp.le.s32.totalorder 1, %s17
    %p310 = scmp.lt.s32.totalorder %s17, 3
    %p311 = pnand %p309, %p310
    %p312 = pneg %p311
    // Predicated region
    $region53: #{sigl_forward.3} parent=5 // pred_check
      _
    $region54: #{sigl_forward.3} parent=5 // pred_check_branch
      %314 = sbr.rel (%p311) target = $region56
    $region55: #{sigl_forward.3} parent=5 // pred_region
      %s315 = ssub.s32 %s17, 1
      %p316 = scmp.lt.s32.totalorder %s26, 1
      %s317 = scalar_select %p316, %s26, 1
      %s318 = smul.addr %s317, 8
      %s319 = scalar_lea.vmem %s0, %s318
      %p320 = pneg %p55
      %p321 = pneg %p52
      %p322 = scmp.lt.s32.totalorder %s27, 0
      %s323 = scalar_select %p322, %s27, 0
      %s324 = scalar_lea.vmem %s1, %s323
      %p325 = pneg %p81
      %p326 = pneg %p78
      %p327 = pneg %p102
      %p328 = pneg %p99
      %p329 = pneg %p123
      %p330 = pneg %p120
      %p331 = pneg %p144
      %p332 = pneg %p141
      %p333 = pneg %p165
      %p334 = pneg %p162
      %p335 = pneg %p186
      %p336 = pneg %p183
      %p337 = pneg %p207
      %p338 = pneg %p204
      %p339 = pneg %p228
      %p340 = pneg %p225
      %p341 = pneg %p256
      %p342 = pneg %p253
      %p343 = scmp.lt.s32.totalorder %s26, 1
      %s344 = scalar_select %p343, %s26, 1
      %p345 = scmp.lt.s32.totalorder %s27, 0
      %s346 = scalar_select %p345, %s27, 0
      %s347 = sadd.s32 %s346, %s344
      %s348 = smul.addr %s347, 8
      %s349 = scalar_lea.vmem %s9, %s348
      %p350 = scmp.lt.s32.totalorder %s26, 1
      %s351 = scalar_select %p350, %s26, 1
      %s352 = smul.addr %s351, 8
      %s353 = scalar_lea.vmem %s0, %s352
      %p354 = scmp.lt.s32.totalorder %s27, 0
      %s355 = scalar_select %p354, %s27, 0
      %s356 = scalar_lea.vmem %s1, %s355
      %p357 = scmp.lt.s32.totalorder %s26, 1
      %s358 = scalar_select %p357, %s26, 1
      %p359 = scmp.lt.s32.totalorder %s27, 0
      %s360 = scalar_select %p359, %s27, 0
      %s361 = sadd.s32 %s360, %s358
      %s362 = smul.addr %s361, 8
      %s363 = scalar_lea.vmem %s9, %s362
      %v364 = vld [vmem:[%s356] sm:$0x1]
      %v365 = vld [vmem:[%s3] sm:$0xff]
      %v366 = vld [vmem:[%s3 + $0x8] sm:$0xff]
      %v367 = vld [vmem:[%s3 + $0x10] sm:$0xff]
      %v368 = vld [vmem:[%s3 + $0x18] sm:$0xff]
      %370 = vset.pattern.permute.xlu0 0
      %371 = vperm.xlu0 %370, %v365
      %v372 = vpop.permute.xlu0 %371
      %375 = vset.pattern.permute.xlu0 0
      %376 = vperm.xlu0 %375, %v366
      %v377 = vpop.permute.xlu0 %376
      %380 = vset.pattern.permute.xlu0 0
      %381 = vperm.xlu0 %380, %v367
      %v382 = vpop.permute.xlu0 %381
      %385 = vset.pattern.permute.xlu0 0
      %386 = vperm.xlu0 %385, %v368
      %v387 = vpop.permute.xlu0 %386
      %v390 = vperm.slane %v364, 0
      %v392 = vmul.f32 %v372, %v390
      %v393 = vmul.f32 %v377, %v390
      %v394 = vmul.f32 %v382, %v390
      %v395 = vmul.f32 %v387, %v390
      %v396 = vld [vmem:[%s4] sm:$0xff]
      %v397 = vld [vmem:[%s4 + $0x8] sm:$0xff]
      %v398 = vld [vmem:[%s4 + $0x10] sm:$0xff]
      %v399 = vld [vmem:[%s4 + $0x18] sm:$0xff]
      %401 = vset.pattern.permute.xlu0 0
      %402 = vperm.xlu0 %401, %v396
      %v403 = vpop.permute.xlu0 %402
      %406 = vset.pattern.permute.xlu0 0
      %407 = vperm.xlu0 %406, %v397
      %v408 = vpop.permute.xlu0 %407
      %411 = vset.pattern.permute.xlu0 0
      %412 = vperm.xlu0 %411, %v398
      %v413 = vpop.permute.xlu0 %412
      %416 = vset.pattern.permute.xlu0 0
      %417 = vperm.xlu0 %416, %v399
      %v418 = vpop.permute.xlu0 %417
      %v420 = vadd.f32 %v392, %v403
      %v421 = vadd.f32 %v393, %v408
      %v422 = vadd.f32 %v394, %v413
      %v423 = vadd.f32 %v395, %v418
      %v424 = vld [vmem:[%s2] sm:$0xff]
      %v425 = vld [vmem:[%s2 + $0x8] sm:$0xff]
      %v426 = vld [vmem:[%s2 + $0x10] sm:$0xff]
      %v427 = vld [vmem:[%s2 + $0x18] sm:$0xff]
      %v428 = vld [vmem:[%s353] sm:$0xff]
      %v429 = vperm.slane %v428, 0
      %v430 = vmul.f32 %v429, %v424
      %v431 = vmul.f32 %v429, %v425
      %v432 = vmul.f32 %v429, %v426
      %v433 = vmul.f32 %v429, %v427
      %435 = vset.pattern.permute.xlu0 0
      %436 = vperm.xlu0 %435, %v430
      %v437 = vpop.permute.xlu0 %436
      %440 = vset.pattern.permute.xlu0 0
      %441 = vperm.xlu0 %440, %v431
      %v442 = vpop.permute.xlu0 %441
      %445 = vset.pattern.permute.xlu0 0
      %446 = vperm.xlu0 %445, %v432
      %v447 = vpop.permute.xlu0 %446
      %450 = vset.pattern.permute.xlu0 0
      %451 = vperm.xlu0 %450, %v433
      %v452 = vpop.permute.xlu0 %451
      %v454 = vadd.f32 %v437, %v420
      %v455 = vadd.f32 %v442, %v421
      %v456 = vadd.f32 %v447, %v422
      %v457 = vadd.f32 %v452, %v423
      %v458 = vperm.slane %v428, 1
      %v459 = vmul.f32 %v458, %v424
      %v460 = vmul.f32 %v458, %v425
      %v461 = vmul.f32 %v458, %v426
      %v462 = vmul.f32 %v458, %v427
      %464 = vset.pattern.permute.xlu0 0
      %465 = vperm.xlu0 %464, %v459
      %v466 = vpop.permute.xlu0 %465
      %469 = vset.pattern.permute.xlu0 0
      %470 = vperm.xlu0 %469, %v460
      %v471 = vpop.permute.xlu0 %470
      %474 = vset.pattern.permute.xlu0 0
      %475 = vperm.xlu0 %474, %v461
      %v476 = vpop.permute.xlu0 %475
      %479 = vset.pattern.permute.xlu0 0
      %480 = vperm.xlu0 %479, %v462
      %v481 = vpop.permute.xlu0 %480
      %v483 = vadd.f32 %v466, %v420
      %v484 = vadd.f32 %v471, %v421
      %v485 = vadd.f32 %v476, %v422
      %v486 = vadd.f32 %v481, %v423
      %v487 = vperm.slane %v428, 2
      %v488 = vmul.f32 %v487, %v424
      %v489 = vmul.f32 %v487, %v425
      %v490 = vmul.f32 %v487, %v426
      %v491 = vmul.f32 %v487, %v427
      %493 = vset.pattern.permute.xlu0 0
      %494 = vperm.xlu0 %493, %v488
      %v495 = vpop.permute.xlu0 %494
      %498 = vset.pattern.permute.xlu0 0
      %499 = vperm.xlu0 %498, %v489
      %v500 = vpop.permute.xlu0 %499
      %503 = vset.pattern.permute.xlu0 0
      %504 = vperm.xlu0 %503, %v490
      %v505 = vpop.permute.xlu0 %504
      %508 = vset.pattern.permute.xlu0 0
      %509 = vperm.xlu0 %508, %v491
      %v510 = vpop.permute.xlu0 %509
      %v512 = vadd.f32 %v495, %v420
      %v513 = vadd.f32 %v500, %v421
      %v514 = vadd.f32 %v505, %v422
      %v515 = vadd.f32 %v510, %v423
      %v516 = vperm.slane %v428, 3
      %v517 = vmul.f32 %v516, %v424
      %v518 = vmul.f32 %v516, %v425
      %v519 = vmul.f32 %v516, %v426
      %v520 = vmul.f32 %v516, %v427
      %522 = vset.pattern.permute.xlu0 0
      %523 = vperm.xlu0 %522, %v517
      %v524 = vpop.permute.xlu0 %523
      %527 = vset.pattern.permute.xlu0 0
      %528 = vperm.xlu0 %527, %v518
      %v529 = vpop.permute.xlu0 %528
      %532 = vset.pattern.permute.xlu0 0
      %533 = vperm.xlu0 %532, %v519
      %v534 = vpop.permute.xlu0 %533
      %537 = vset.pattern.permute.xlu0 0
      %538 = vperm.xlu0 %537, %v520
      %v539 = vpop.permute.xlu0 %538
      %v541 = vadd.f32 %v524, %v420
      %v542 = vadd.f32 %v529, %v421
      %v543 = vadd.f32 %v534, %v422
      %v544 = vadd.f32 %v539, %v423
      %v545 = vperm.slane %v428, 4
      %v546 = vmul.f32 %v545, %v424
      %v547 = vmul.f32 %v545, %v425
      %v548 = vmul.f32 %v545, %v426
      %v549 = vmul.f32 %v545, %v427
      %551 = vset.pattern.permute.xlu0 0
      %552 = vperm.xlu0 %551, %v546
      %v553 = vpop.permute.xlu0 %552
      %556 = vset.pattern.permute.xlu0 0
      %557 = vperm.xlu0 %556, %v547
      %v558 = vpop.permute.xlu0 %557
      %561 = vset.pattern.permute.xlu0 0
      %562 = vperm.xlu0 %561, %v548
      %v563 = vpop.permute.xlu0 %562
      %566 = vset.pattern.permute.xlu0 0
      %567 = vperm.xlu0 %566, %v549
      %v568 = vpop.permute.xlu0 %567
      %v570 = vadd.f32 %v553, %v420
      %v571 = vadd.f32 %v558, %v421
      %v572 = vadd.f32 %v563, %v422
      %v573 = vadd.f32 %v568, %v423
      %v574 = vperm.slane %v428, 5
      %v575 = vmul.f32 %v574, %v424
      %v576 = vmul.f32 %v574, %v425
      %v577 = vmul.f32 %v574, %v426
      %v578 = vmul.f32 %v574, %v427
      %580 = vset.pattern.permute.xlu0 0
      %581 = vperm.xlu0 %580, %v575
      %v582 = vpop.permute.xlu0 %581
      %585 = vset.pattern.permute.xlu0 0
      %586 = vperm.xlu0 %585, %v576
      %v587 = vpop.permute.xlu0 %586
      %590 = vset.pattern.permute.xlu0 0
      %591 = vperm.xlu0 %590, %v577
      %v592 = vpop.permute.xlu0 %591
      %595 = vset.pattern.permute.xlu0 0
      %596 = vperm.xlu0 %595, %v578
      %v597 = vpop.permute.xlu0 %596
      %v599 = vadd.f32 %v582, %v420
      %v600 = vadd.f32 %v587, %v421
      %v601 = vadd.f32 %v592, %v422
      %v602 = vadd.f32 %v597, %v423
      %v603 = vperm.slane %v428, 6
      %v604 = vmul.f32 %v603, %v424
      %v605 = vmul.f32 %v603, %v425
      %v606 = vmul.f32 %v603, %v426
      %v607 = vmul.f32 %v603, %v427
      %609 = vset.pattern.permute.xlu0 0
      %610 = vperm.xlu0 %609, %v604
      %v611 = vpop.permute.xlu0 %610
      %614 = vset.pattern.permute.xlu0 0
      %615 = vperm.xlu0 %614, %v605
      %v616 = vpop.permute.xlu0 %615
      %619 = vset.pattern.permute.xlu0 0
      %620 = vperm.xlu0 %619, %v606
      %v621 = vpop.permute.xlu0 %620
      %624 = vset.pattern.permute.xlu0 0
      %625 = vperm.xlu0 %624, %v607
      %v626 = vpop.permute.xlu0 %625
      %v628 = vadd.f32 %v611, %v420
      %v629 = vadd.f32 %v616, %v421
      %v630 = vadd.f32 %v621, %v422
      %v631 = vadd.f32 %v626, %v423
      %v632 = vperm.slane %v428, 7
      %v633 = vmul.f32 %v632, %v424
      %v634 = vmul.f32 %v632, %v425
      %v635 = vmul.f32 %v632, %v426
      %v636 = vmul.f32 %v632, %v427
      %638 = vset.pattern.permute.xlu0 0
      %639 = vperm.xlu0 %638, %v633
      %v640 = vpop.permute.xlu0 %639
      %643 = vset.pattern.permute.xlu0 0
      %644 = vperm.xlu0 %643, %v634
      %v645 = vpop.permute.xlu0 %644
      %648 = vset.pattern.permute.xlu0 0
      %649 = vperm.xlu0 %648, %v635
      %v650 = vpop.permute.xlu0 %649
      %653 = vset.pattern.permute.xlu0 0
      %654 = vperm.xlu0 %653, %v636
      %v655 = vpop.permute.xlu0 %654
      %v657 = vadd.f32 %v640, %v420
      %v658 = vadd.f32 %v645, %v421
      %v659 = vadd.f32 %v650, %v422
      %v660 = vadd.f32 %v655, %v423
      %665 = vrot.lane.b32.xlu0 %v483, 16
      %v666 = vpop.permute.xlu0 %665
      %667 = vrot.lane.b32.xlu0 %v484, 16
      %v668 = vpop.permute.xlu0 %667
      %669 = vrot.lane.b32.xlu0 %v485, 16
      %v670 = vpop.permute.xlu0 %669
      %671 = vrot.lane.b32.xlu0 %v486, 16
      %v672 = vpop.permute.xlu0 %671
      %681 = vrot.lane.b32.xlu0 %v512, 32
      %v682 = vpop.permute.xlu0 %681
      %683 = vrot.lane.b32.xlu0 %v513, 32
      %v684 = vpop.permute.xlu0 %683
      %685 = vrot.lane.b32.xlu0 %v514, 32
      %v686 = vpop.permute.xlu0 %685
      %687 = vrot.lane.b32.xlu0 %v515, 32
      %v688 = vpop.permute.xlu0 %687
      %697 = vrot.lane.b32.xlu0 %v541, 48
      %v698 = vpop.permute.xlu0 %697
      %699 = vrot.lane.b32.xlu0 %v542, 48
      %v700 = vpop.permute.xlu0 %699
      %701 = vrot.lane.b32.xlu0 %v543, 48
      %v702 = vpop.permute.xlu0 %701
      %703 = vrot.lane.b32.xlu0 %v544, 48
      %v704 = vpop.permute.xlu0 %703
      %713 = vrot.lane.b32.xlu0 %v570, 64
      %v714 = vpop.permute.xlu0 %713
      %715 = vrot.lane.b32.xlu0 %v571, 64
      %v716 = vpop.permute.xlu0 %715
      %717 = vrot.lane.b32.xlu0 %v572, 64
      %v718 = vpop.permute.xlu0 %717
      %719 = vrot.lane.b32.xlu0 %v573, 64
      %v720 = vpop.permute.xlu0 %719
      %729 = vrot.lane.b32.xlu0 %v599, 80
      %v730 = vpop.permute.xlu0 %729
      %731 = vrot.lane.b32.xlu0 %v600, 80
      %v732 = vpop.permute.xlu0 %731
      %733 = vrot.lane.b32.xlu0 %v601, 80
      %v734 = vpop.permute.xlu0 %733
      %735 = vrot.lane.b32.xlu0 %v602, 80
      %v736 = vpop.permute.xlu0 %735
      %745 = vrot.lane.b32.xlu0 %v628, 96
      %v746 = vpop.permute.xlu0 %745
      %747 = vrot.lane.b32.xlu0 %v629, 96
      %v748 = vpop.permute.xlu0 %747
      %749 = vrot.lane.b32.xlu0 %v630, 96
      %v750 = vpop.permute.xlu0 %749
      %751 = vrot.lane.b32.xlu0 %v631, 96
      %v752 = vpop.permute.xlu0 %751
      %761 = vrot.lane.b32.xlu0 %v657, 112
      %v762 = vpop.permute.xlu0 %761
      %763 = vrot.lane.b32.xlu0 %v658, 112
      %v764 = vpop.permute.xlu0 %763
      %765 = vrot.lane.b32.xlu0 %v659, 112
      %v766 = vpop.permute.xlu0 %765
      %767 = vrot.lane.b32.xlu0 %v660, 112
      %v768 = vpop.permute.xlu0 %767
      %vm773 = vcmask 130048
      %v774 = vsel %vm773, %v454, %v666
      %v775 = vsel %vm773, %v455, %v668
      %v776 = vsel %vm773, %v456, %v670
      %v777 = vsel %vm773, %v457, %v672
      %vm778 = vcmask 261120
      %v779 = vsel %vm778, %v774, %v682
      %v780 = vsel %vm778, %v775, %v684
      %v781 = vsel %vm778, %v776, %v686
      %v782 = vsel %vm778, %v777, %v688
      %vm783 = vcmask 392192
      %v784 = vsel %vm783, %v779, %v698
      %v785 = vsel %vm783, %v780, %v700
      %v786 = vsel %vm783, %v781, %v702
      %v787 = vsel %vm783, %v782, %v704
      %vm788 = vcmask 523264
      %v789 = vsel %vm788, %v784, %v714
      %v790 = vsel %vm788, %v785, %v716
      %v791 = vsel %vm788, %v786, %v718
      %v792 = vsel %vm788, %v787, %v720
      %vm793 = vcmask 654336
      %v794 = vsel %vm793, %v789, %v730
      %v795 = vsel %vm793, %v790, %v732
      %v796 = vsel %vm793, %v791, %v734
      %v797 = vsel %vm793, %v792, %v736
      %vm798 = vcmask 785408
      %v799 = vsel %vm798, %v794, %v746
      %v800 = vsel %vm798, %v795, %v748
      %v801 = vsel %vm798, %v796, %v750
      %v802 = vsel %vm798, %v797, %v752
      %vm803 = vcmask 916480
      %v804 = vsel %vm803, %v799, %v762
      %v805 = vsel %vm803, %v800, %v764
      %v806 = vsel %vm803, %v801, %v766
      %v807 = vsel %vm803, %v802, %v768
      %v808 = vand.u32 2147483647, %v804
      %vm809 = vcmp.le.f32.partialorder %v808, 0.7853982
      %vm810 = vcmp.lt.s32.totalorder %v804, 0
      %v811 = vand.u32 %v804, 2139095040
      %v812 = vshrl.u32 %v811, 23
      %v813 = vsub.s32 %v812, 127
      %v814 = vand.u32 2147483647, %v804
      %v815 = vand.u32 %v814, 8388607
      %v816 = vor.u32 %v815, 8388608
      %v817 = vsub.s32 0, %v816
      %v818 = vadd.s32 %v813, 1
      %vm819 = vcmp.gt.s32.totalorder %v818, 0
      %v820 = vsel %vm819, %v818, 0
      %v821 = vshrl.u32 %v820, 5
      %v822 = vand.u32 %v820, 31
      %v823 = vsub.s32 32, %v822
      %v824 = vshrl.u32 683565275, %v823
      %v825 = vshll.u32 683565275, %v822
      %v826 = vshrl.u32 2475754826, %v823
      %v827 = vor.u32 %v825, %v826
      %v828 = vshll.u32 2475754826, %v822
      %v829 = vshrl.u32 2131351028, %v823
      %v830 = vor.u32 %v828, %v829
      %v831 = vshll.u32 2131351028, %v822
      %v832 = vshrl.u32 2102212464, %v823
      %v833 = vor.u32 %v831, %v832
      %v834 = vshll.u32 2102212464, %v822
      %v835 = vshrl.u32 920167782, %v823
      %v836 = vor.u32 %v834, %v835
      %v837 = vshll.u32 920167782, %v822
      %v838 = vshrl.u32 1326507024, %v823
      %v839 = vor.u32 %v837, %v838
      %vm840 = vcmp.lt.s32.totalorder %v821, 1
      %vm841 = vcmp.lt.s32.totalorder %v821, 2
      %vm842 = vcmp.lt.s32.totalorder %v821, 3
      %vm843 = vcmp.lt.s32.totalorder %v821, 4
      %v844 = vsel %vm840, %v824, %v827
      %v845 = vsel %vm843, %v833, 2102212464
      %v846 = vsel %vm842, %v830, %v845
      %v847 = vsel %vm841, %v844, %v846
      %v848 = vsel %vm840, %v827, %v830
      %v849 = vsel %vm843, %v836, 920167782
      %v850 = vsel %vm842, %v833, %v849
      %v851 = vsel %vm841, %v848, %v850
      %v852 = vsel %vm840, %v830, %v833
      %v853 = vsel %vm843, %v839, 1326507024
      %v854 = vsel %vm842, %v836, %v853
      %v855 = vsel %vm841, %v852, %v854
      %v856 = vshll.u32 %v816, 8
      %v857 = vand.u32 %v856, 65535
      %v858 = vshrl.u32 %v856, 16
      %v859 = vand.u32 %v855, 65535
      %v860 = vshrl.u32 %v855, 16
      %v861 = vmul.u32 %v857, %v859
      %v862 = vmul.u32 %v857, %v860
      %v863 = vmul.u32 %v858, %v859
      %v864 = vmul.u32 %v858, %v860
      %v865 = vshll.u32 %v862, 16
      %v866 = vshrl.u32 %v862, 16
      %v867 = vshll.u32 %v863, 16
      %v868 = vshrl.u32 %v863, 16
      %vm869 = vc.u32 %v861, %v865
      %v870 = vsel %vm869, 1, 0
      %v871 = vadd.s32 %v861, %v865
      %v872 = vadd.s32 %v864, %v870
      %vm873 = vc.u32 %v871, %v867
      %v874 = vsel %vm873, 1, 0
      %v875 = vadd.s32 %v871, %v867
      %v876 = vadd.s32 %v872, %v874
      %v877 = vadd.s32 %v876, %v866
      %v878 = vadd.s32 %v877, %v868
      %v879 = vand.u32 %v856, 65535
      %v880 = vshrl.u32 %v856, 16
      %v881 = vand.u32 %v851, 65535
      %v882 = vshrl.u32 %v851, 16
      %v883 = vmul.u32 %v879, %v881
      %v884 = vmul.u32 %v879, %v882
      %v885 = vmul.u32 %v880, %v881
      %v886 = vmul.u32 %v880, %v882
      %v887 = vshll.u32 %v884, 16
      %v888 = vshrl.u32 %v884, 16
      %v889 = vshll.u32 %v885, 16
      %v890 = vshrl.u32 %v885, 16
      %vm891 = vc.u32 %v883, %v887
      %v892 = vsel %vm891, 1, 0
      %v893 = vadd.s32 %v883, %v887
      %v894 = vadd.s32 %v886, %v892
      %vm895 = vc.u32 %v893, %v889
      %v896 = vsel %vm895, 1, 0
      %v897 = vadd.s32 %v893, %v889
      %v898 = vadd.s32 %v894, %v896
      %v899 = vadd.s32 %v898, %v888
      %v900 = vadd.s32 %v899, %v890
      %v901 = vmul.u32 %v856, %v847
      %v902 = vadd.s32 %v878, %v897
      %vm903 = vc.u32 %v878, %v897
      %v904 = vadd.s32 %v900, 1
      %v905 = vsel %vm903, %v904, %v900
      %v906 = vadd.s32 %v901, %v905
      %v907 = vadd.s32 %v906, 536870912
      %v908 = vshrl.u32 %v907, 30
      %v909 = vshll.u32 %v908, 30
      %v910 = vsub.s32 %v906, %v909
      %vm911 = vcmp.lt.s32.totalorder %v910, 0
      %v912 = vsub.s32 0, %v910
      %v913 = vsel %vm911, %v912, %v910
      %v914 = vclz %v913
      %v915 = vsub.s32 %v914, 2
      %vm916 = vcmp.gt.s32.totalorder 0, %v915
      %v917 = vsel %vm916, 0, %v915
      %v918 = vsub.s32 32, %v917
      %v919 = vshll.u32 %v910, %v917
      %v920 = vshrl.u32 %v902, %v918
      %v921 = vor.u32 %v919, %v920
      %v922 = vsub.s32 4294967266, %v917
      %v923 = vadd.s32 %v922, 127
      %v924 = vshll.u32 %v923, 23
      %v925 = vor.u32 4788187, %v924
      %v926 = vand.u32 2147483647, %v925
      %v928 = vcvt.s32.f32 %v921
      %v929 = vmul.f32 %v928, %v926
      %v930 = vxor.u32 %v929, 2147483648
      %v931 = vsel %vm810, %v930, %v929
      %v932 = vsub.s32 4, %v908
      %v933 = vsel %vm810, %v932, %v908
      %v934 = vsel %vm809, %v804, %v931
      %v935 = vsel %vm809, 0, %v933
      %v936 = vmul.f32 %v934, %v934
      %v937 = vmul.f32 %v936, -0.001358992
      %v938 = vadd.f32 %v937, 0.041655596
      %v939 = vmul.f32 %v936, %v938
      %v940 = vadd.f32 %v939, -0.4999988
      %v941 = vmul.f32 %v936, %v940
      %v942 = vadd.f32 1.0, %v941
      %v943 = vmul.f32 %v934, %v934
      %v944 = vmul.f32 %v943, -0.00019511016
      %v945 = vadd.f32 %v944, 0.008332121
      %v946 = vmul.f32 %v943, %v945
      %v947 = vadd.f32 %v946, -0.16666654
      %v948 = vmul.f32 %v943, %v947
      %v949 = vadd.f32 %v948, 1.0
      %v950 = vmul.f32 %v949, %v934
      %vm951 = vweird.f32 %v804
      %v952 = vadd.s32 %v935, 3
      %v953 = vand.u32 %v952, 3
      %vm954 = vcmp.lt.s32.totalorder %v953, 2
      %vm955 = vcmp.eq.s32.totalorder %v953, 0
      %v956 = vxor.u32 %v950, 2147483648
      %v957 = vsel %vm955, %v942, %v956
      %vm958 = vcmp.eq.s32.totalorder %v953, 2
      %v959 = vxor.u32 %v942, 2147483648
      %v960 = vsel %vm958, %v959, %v950
      %v961 = vsel %vm954, %v957, %v960
      %v962 = vsel %vm951, nan, %v961
      %v963 = vand.u32 2147483647, %v805
      %vm964 = vcmp.le.f32.partialorder %v963, 0.7853982
      %vm965 = vcmp.lt.s32.totalorder %v805, 0
      %v966 = vand.u32 %v805, 2139095040
      %v967 = vshrl.u32 %v966, 23
      %v968 = vsub.s32 %v967, 127
      %v969 = vand.u32 2147483647, %v805
      %v970 = vand.u32 %v969, 8388607
      %v971 = vor.u32 %v970, 8388608
      %v972 = vsub.s32 0, %v971
      %v973 = vadd.s32 %v968, 1
      %vm974 = vcmp.gt.s32.totalorder %v973, 0
      %v975 = vsel %vm974, %v973, 0
      %v976 = vshrl.u32 %v975, 5
      %v977 = vand.u32 %v975, 31
      %v978 = vsub.s32 32, %v977
      %v979 = vshrl.u32 683565275, %v978
      %v980 = vshll.u32 683565275, %v977
      %v981 = vshrl.u32 2475754826, %v978
      %v982 = vor.u32 %v980, %v981
      %v983 = vshll.u32 2475754826, %v977
      %v984 = vshrl.u32 2131351028, %v978
      %v985 = vor.u32 %v983, %v984
      %v986 = vshll.u32 2131351028, %v977
      %v987 = vshrl.u32 2102212464, %v978
      %v988 = vor.u32 %v986, %v987
      %v989 = vshll.u32 2102212464, %v977
      %v990 = vshrl.u32 920167782, %v978
      %v991 = vor.u32 %v989, %v990
      %v992 = vshll.u32 920167782, %v977
      %v993 = vshrl.u32 1326507024, %v978
      %v994 = vor.u32 %v992, %v993
      %vm995 = vcmp.lt.s32.totalorder %v976, 1
      %vm996 = vcmp.lt.s32.totalorder %v976, 2
      %vm997 = vcmp.lt.s32.totalorder %v976, 3
      %vm998 = vcmp.lt.s32.totalorder %v976, 4
      %v999 = vsel %vm995, %v979, %v982
      %v1000 = vsel %vm998, %v988, 2102212464
      %v1001 = vsel %vm997, %v985, %v1000
      %v1002 = vsel %vm996, %v999, %v1001
      %v1003 = vsel %vm995, %v982, %v985
      %v1004 = vsel %vm998, %v991, 920167782
      %v1005 = vsel %vm997, %v988, %v1004
      %v1006 = vsel %vm996, %v1003, %v1005
      %v1007 = vsel %vm995, %v985, %v988
      %v1008 = vsel %vm998, %v994, 1326507024
      %v1009 = vsel %vm997, %v991, %v1008
      %v1010 = vsel %vm996, %v1007, %v1009
      %v1011 = vshll.u32 %v971, 8
      %v1012 = vand.u32 %v1011, 65535
      %v1013 = vshrl.u32 %v1011, 16
      %v1014 = vand.u32 %v1010, 65535
      %v1015 = vshrl.u32 %v1010, 16
      %v1016 = vmul.u32 %v1012, %v1014
      %v1017 = vmul.u32 %v1012, %v1015
      %v1018 = vmul.u32 %v1013, %v1014
      %v1019 = vmul.u32 %v1013, %v1015
      %v1020 = vshll.u32 %v1017, 16
      %v1021 = vshrl.u32 %v1017, 16
      %v1022 = vshll.u32 %v1018, 16
      %v1023 = vshrl.u32 %v1018, 16
      %vm1024 = vc.u32 %v1016, %v1020
      %v1025 = vsel %vm1024, 1, 0
      %v1026 = vadd.s32 %v1016, %v1020
      %v1027 = vadd.s32 %v1019, %v1025
      %vm1028 = vc.u32 %v1026, %v1022
      %v1029 = vsel %vm1028, 1, 0
      %v1030 = vadd.s32 %v1026, %v1022
      %v1031 = vadd.s32 %v1027, %v1029
      %v1032 = vadd.s32 %v1031, %v1021
      %v1033 = vadd.s32 %v1032, %v1023
      %v1034 = vand.u32 %v1011, 65535
      %v1035 = vshrl.u32 %v1011, 16
      %v1036 = vand.u32 %v1006, 65535
      %v1037 = vshrl.u32 %v1006, 16
      %v1038 = vmul.u32 %v1034, %v1036
      %v1039 = vmul.u32 %v1034, %v1037
      %v1040 = vmul.u32 %v1035, %v1036
      %v1041 = vmul.u32 %v1035, %v1037
      %v1042 = vshll.u32 %v1039, 16
      %v1043 = vshrl.u32 %v1039, 16
      %v1044 = vshll.u32 %v1040, 16
      %v1045 = vshrl.u32 %v1040, 16
      %vm1046 = vc.u32 %v1038, %v1042
      %v1047 = vsel %vm1046, 1, 0
      %v1048 = vadd.s32 %v1038, %v1042
      %v1049 = vadd.s32 %v1041, %v1047
      %vm1050 = vc.u32 %v1048, %v1044
      %v1051 = vsel %vm1050, 1, 0
      %v1052 = vadd.s32 %v1048, %v1044
      %v1053 = vadd.s32 %v1049, %v1051
      %v1054 = vadd.s32 %v1053, %v1043
      %v1055 = vadd.s32 %v1054, %v1045
      %v1056 = vmul.u32 %v1011, %v1002
      %v1057 = vadd.s32 %v1033, %v1052
      %vm1058 = vc.u32 %v1033, %v1052
      %v1059 = vadd.s32 %v1055, 1
      %v1060 = vsel %vm1058, %v1059, %v1055
      %v1061 = vadd.s32 %v1056, %v1060
      %v1062 = vadd.s32 %v1061, 536870912
      %v1063 = vshrl.u32 %v1062, 30
      %v1064 = vshll.u32 %v1063, 30
      %v1065 = vsub.s32 %v1061, %v1064
      %vm1066 = vcmp.lt.s32.totalorder %v1065, 0
      %v1067 = vsub.s32 0, %v1065
      %v1068 = vsel %vm1066, %v1067, %v1065
      %v1069 = vclz %v1068
      %v1070 = vsub.s32 %v1069, 2
      %vm1071 = vcmp.gt.s32.totalorder 0, %v1070
      %v1072 = vsel %vm1071, 0, %v1070
      %v1073 = vsub.s32 32, %v1072
      %v1074 = vshll.u32 %v1065, %v1072
      %v1075 = vshrl.u32 %v1057, %v1073
      %v1076 = vor.u32 %v1074, %v1075
      %v1077 = vsub.s32 4294967266, %v1072
      %v1078 = vadd.s32 %v1077, 127
      %v1079 = vshll.u32 %v1078, 23
      %v1080 = vor.u32 4788187, %v1079
      %v1081 = vand.u32 2147483647, %v1080
      %v1083 = vcvt.s32.f32 %v1076
      %v1084 = vmul.f32 %v1083, %v1081
      %v1085 = vxor.u32 %v1084, 2147483648
      %v1086 = vsel %vm965, %v1085, %v1084
      %v1087 = vsub.s32 4, %v1063
      %v1088 = vsel %vm965, %v1087, %v1063
      %v1089 = vsel %vm964, %v805, %v1086
      %v1090 = vsel %vm964, 0, %v1088
      %v1091 = vmul.f32 %v1089, %v1089
      %v1092 = vmul.f32 %v1091, -0.001358992
      %v1093 = vadd.f32 %v1092, 0.041655596
      %v1094 = vmul.f32 %v1091, %v1093
      %v1095 = vadd.f32 %v1094, -0.4999988
      %v1096 = vmul.f32 %v1091, %v1095
      %v1097 = vadd.f32 1.0, %v1096
      %v1098 = vmul.f32 %v1089, %v1089
      %v1099 = vmul.f32 %v1098, -0.00019511016
      %v1100 = vadd.f32 %v1099, 0.008332121
      %v1101 = vmul.f32 %v1098, %v1100
      %v1102 = vadd.f32 %v1101, -0.16666654
      %v1103 = vmul.f32 %v1098, %v1102
      %v1104 = vadd.f32 %v1103, 1.0
      %v1105 = vmul.f32 %v1104, %v1089
      %vm1106 = vweird.f32 %v805
      %v1107 = vadd.s32 %v1090, 3
      %v1108 = vand.u32 %v1107, 3
      %vm1109 = vcmp.lt.s32.totalorder %v1108, 2
      %vm1110 = vcmp.eq.s32.totalorder %v1108, 0
      %v1111 = vxor.u32 %v1105, 2147483648
      %v1112 = vsel %vm1110, %v1097, %v1111
      %vm1113 = vcmp.eq.s32.totalorder %v1108, 2
      %v1114 = vxor.u32 %v1097, 2147483648
      %v1115 = vsel %vm1113, %v1114, %v1105
      %v1116 = vsel %vm1109, %v1112, %v1115
      %v1117 = vsel %vm1106, nan, %v1116
      %v1118 = vand.u32 2147483647, %v806
      %vm1119 = vcmp.le.f32.partialorder %v1118, 0.7853982
      %vm1120 = vcmp.lt.s32.totalorder %v806, 0
      %v1121 = vand.u32 %v806, 2139095040
      %v1122 = vshrl.u32 %v1121, 23
      %v1123 = vsub.s32 %v1122, 127
      %v1124 = vand.u32 2147483647, %v806
      %v1125 = vand.u32 %v1124, 8388607
      %v1126 = vor.u32 %v1125, 8388608
      %v1127 = vsub.s32 0, %v1126
      %v1128 = vadd.s32 %v1123, 1
      %vm1129 = vcmp.gt.s32.totalorder %v1128, 0
      %v1130 = vsel %vm1129, %v1128, 0
      %v1131 = vshrl.u32 %v1130, 5
      %v1132 = vand.u32 %v1130, 31
      %v1133 = vsub.s32 32, %v1132
      %v1134 = vshrl.u32 683565275, %v1133
      %v1135 = vshll.u32 683565275, %v1132
      %v1136 = vshrl.u32 2475754826, %v1133
      %v1137 = vor.u32 %v1135, %v1136
      %v1138 = vshll.u32 2475754826, %v1132
      %v1139 = vshrl.u32 2131351028, %v1133
      %v1140 = vor.u32 %v1138, %v1139
      %v1141 = vshll.u32 2131351028, %v1132
      %v1142 = vshrl.u32 2102212464, %v1133
      %v1143 = vor.u32 %v1141, %v1142
      %v1144 = vshll.u32 2102212464, %v1132
      %v1145 = vshrl.u32 920167782, %v1133
      %v1146 = vor.u32 %v1144, %v1145
      %v1147 = vshll.u32 920167782, %v1132
      %v1148 = vshrl.u32 1326507024, %v1133
      %v1149 = vor.u32 %v1147, %v1148
      %vm1150 = vcmp.lt.s32.totalorder %v1131, 1
      %vm1151 = vcmp.lt.s32.totalorder %v1131, 2
      %vm1152 = vcmp.lt.s32.totalorder %v1131, 3
      %vm1153 = vcmp.lt.s32.totalorder %v1131, 4
      %v1154 = vsel %vm1150, %v1134, %v1137
      %v1155 = vsel %vm1153, %v1143, 2102212464
      %v1156 = vsel %vm1152, %v1140, %v1155
      %v1157 = vsel %vm1151, %v1154, %v1156
      %v1158 = vsel %vm1150, %v1137, %v1140
      %v1159 = vsel %vm1153, %v1146, 920167782
      %v1160 = vsel %vm1152, %v1143, %v1159
      %v1161 = vsel %vm1151, %v1158, %v1160
      %v1162 = vsel %vm1150, %v1140, %v1143
      %v1163 = vsel %vm1153, %v1149, 1326507024
      %v1164 = vsel %vm1152, %v1146, %v1163
      %v1165 = vsel %vm1151, %v1162, %v1164
      %v1166 = vshll.u32 %v1126, 8
      %v1167 = vand.u32 %v1166, 65535
      %v1168 = vshrl.u32 %v1166, 16
      %v1169 = vand.u32 %v1165, 65535
      %v1170 = vshrl.u32 %v1165, 16
      %v1171 = vmul.u32 %v1167, %v1169
      %v1172 = vmul.u32 %v1167, %v1170
      %v1173 = vmul.u32 %v1168, %v1169
      %v1174 = vmul.u32 %v1168, %v1170
      %v1175 = vshll.u32 %v1172, 16
      %v1176 = vshrl.u32 %v1172, 16
      %v1177 = vshll.u32 %v1173, 16
      %v1178 = vshrl.u32 %v1173, 16
      %vm1179 = vc.u32 %v1171, %v1175
      %v1180 = vsel %vm1179, 1, 0
      %v1181 = vadd.s32 %v1171, %v1175
      %v1182 = vadd.s32 %v1174, %v1180
      %vm1183 = vc.u32 %v1181, %v1177
      %v1184 = vsel %vm1183, 1, 0
      %v1185 = vadd.s32 %v1181, %v1177
      %v1186 = vadd.s32 %v1182, %v1184
      %v1187 = vadd.s32 %v1186, %v1176
      %v1188 = vadd.s32 %v1187, %v1178
      %v1189 = vand.u32 %v1166, 65535
      %v1190 = vshrl.u32 %v1166, 16
      %v1191 = vand.u32 %v1161, 65535
      %v1192 = vshrl.u32 %v1161, 16
      %v1193 = vmul.u32 %v1189, %v1191
      %v1194 = vmul.u32 %v1189, %v1192
      %v1195 = vmul.u32 %v1190, %v1191
      %v1196 = vmul.u32 %v1190, %v1192
      %v1197 = vshll.u32 %v1194, 16
      %v1198 = vshrl.u32 %v1194, 16
      %v1199 = vshll.u32 %v1195, 16
      %v1200 = vshrl.u32 %v1195, 16
      %vm1201 = vc.u32 %v1193, %v1197
      %v1202 = vsel %vm1201, 1, 0
      %v1203 = vadd.s32 %v1193, %v1197
      %v1204 = vadd.s32 %v1196, %v1202
      %vm1205 = vc.u32 %v1203, %v1199
      %v1206 = vsel %vm1205, 1, 0
      %v1207 = vadd.s32 %v1203, %v1199
      %v1208 = vadd.s32 %v1204, %v1206
      %v1209 = vadd.s32 %v1208, %v1198
      %v1210 = vadd.s32 %v1209, %v1200
      %v1211 = vmul.u32 %v1166, %v1157
      %v1212 = vadd.s32 %v1188, %v1207
      %vm1213 = vc.u32 %v1188, %v1207
      %v1214 = vadd.s32 %v1210, 1
      %v1215 = vsel %vm1213, %v1214, %v1210
      %v1216 = vadd.s32 %v1211, %v1215
      %v1217 = vadd.s32 %v1216, 536870912
      %v1218 = vshrl.u32 %v1217, 30
      %v1219 = vshll.u32 %v1218, 30
      %v1220 = vsub.s32 %v1216, %v1219
      %vm1221 = vcmp.lt.s32.totalorder %v1220, 0
      %v1222 = vsub.s32 0, %v1220
      %v1223 = vsel %vm1221, %v1222, %v1220
      %v1224 = vclz %v1223
      %v1225 = vsub.s32 %v1224, 2
      %vm1226 = vcmp.gt.s32.totalorder 0, %v1225
      %v1227 = vsel %vm1226, 0, %v1225
      %v1228 = vsub.s32 32, %v1227
      %v1229 = vshll.u32 %v1220, %v1227
      %v1230 = vshrl.u32 %v1212, %v1228
      %v1231 = vor.u32 %v1229, %v1230
      %v1232 = vsub.s32 4294967266, %v1227
      %v1233 = vadd.s32 %v1232, 127
      %v1234 = vshll.u32 %v1233, 23
      %v1235 = vor.u32 4788187, %v1234
      %v1236 = vand.u32 2147483647, %v1235
      %v1238 = vcvt.s32.f32 %v1231
      %v1239 = vmul.f32 %v1238, %v1236
      %v1240 = vxor.u32 %v1239, 2147483648
      %v1241 = vsel %vm1120, %v1240, %v1239
      %v1242 = vsub.s32 4, %v1218
      %v1243 = vsel %vm1120, %v1242, %v1218
      %v1244 = vsel %vm1119, %v806, %v1241
      %v1245 = vsel %vm1119, 0, %v1243
      %v1246 = vmul.f32 %v1244, %v1244
      %v1247 = vmul.f32 %v1246, -0.001358992
      %v1248 = vadd.f32 %v1247, 0.041655596
      %v1249 = vmul.f32 %v1246, %v1248
      %v1250 = vadd.f32 %v1249, -0.4999988
      %v1251 = vmul.f32 %v1246, %v1250
      %v1252 = vadd.f32 1.0, %v1251
      %v1253 = vmul.f32 %v1244, %v1244
      %v1254 = vmul.f32 %v1253, -0.00019511016
      %v1255 = vadd.f32 %v1254, 0.008332121
      %v1256 = vmul.f32 %v1253, %v1255
      %v1257 = vadd.f32 %v1256, -0.16666654
      %v1258 = vmul.f32 %v1253, %v1257
      %v1259 = vadd.f32 %v1258, 1.0
      %v1260 = vmul.f32 %v1259, %v1244
      %vm1261 = vweird.f32 %v806
      %v1262 = vadd.s32 %v1245, 3
      %v1263 = vand.u32 %v1262, 3
      %vm1264 = vcmp.lt.s32.totalorder %v1263, 2
      %vm1265 = vcmp.eq.s32.totalorder %v1263, 0
      %v1266 = vxor.u32 %v1260, 2147483648
      %v1267 = vsel %vm1265, %v1252, %v1266
      %vm1268 = vcmp.eq.s32.totalorder %v1263, 2
      %v1269 = vxor.u32 %v1252, 2147483648
      %v1270 = vsel %vm1268, %v1269, %v1260
      %v1271 = vsel %vm1264, %v1267, %v1270
      %v1272 = vsel %vm1261, nan, %v1271
      %v1273 = vand.u32 2147483647, %v807
      %vm1274 = vcmp.le.f32.partialorder %v1273, 0.7853982
      %vm1275 = vcmp.lt.s32.totalorder %v807, 0
      %v1276 = vand.u32 %v807, 2139095040
      %v1277 = vshrl.u32 %v1276, 23
      %v1278 = vsub.s32 %v1277, 127
      %v1279 = vand.u32 2147483647, %v807
      %v1280 = vand.u32 %v1279, 8388607
      %v1281 = vor.u32 %v1280, 8388608
      %v1282 = vsub.s32 0, %v1281
      %v1283 = vadd.s32 %v1278, 1
      %vm1284 = vcmp.gt.s32.totalorder %v1283, 0
      %v1285 = vsel %vm1284, %v1283, 0
      %v1286 = vshrl.u32 %v1285, 5
      %v1287 = vand.u32 %v1285, 31
      %v1288 = vsub.s32 32, %v1287
      %v1289 = vshrl.u32 683565275, %v1288
      %v1290 = vshll.u32 683565275, %v1287
      %v1291 = vshrl.u32 2475754826, %v1288
      %v1292 = vor.u32 %v1290, %v1291
      %v1293 = vshll.u32 2475754826, %v1287
      %v1294 = vshrl.u32 2131351028, %v1288
      %v1295 = vor.u32 %v1293, %v1294
      %v1296 = vshll.u32 2131351028, %v1287
      %v1297 = vshrl.u32 2102212464, %v1288
      %v1298 = vor.u32 %v1296, %v1297
      %v1299 = vshll.u32 2102212464, %v1287
      %v1300 = vshrl.u32 920167782, %v1288
      %v1301 = vor.u32 %v1299, %v1300
      %v1302 = vshll.u32 920167782, %v1287
      %v1303 = vshrl.u32 1326507024, %v1288
      %v1304 = vor.u32 %v1302, %v1303
      %vm1305 = vcmp.lt.s32.totalorder %v1286, 1
      %vm1306 = vcmp.lt.s32.totalorder %v1286, 2
      %vm1307 = vcmp.lt.s32.totalorder %v1286, 3
      %vm1308 = vcmp.lt.s32.totalorder %v1286, 4
      %v1309 = vsel %vm1305, %v1289, %v1292
      %v1310 = vsel %vm1308, %v1298, 2102212464
      %v1311 = vsel %vm1307, %v1295, %v1310
      %v1312 = vsel %vm1306, %v1309, %v1311
      %v1313 = vsel %vm1305, %v1292, %v1295
      %v1314 = vsel %vm1308, %v1301, 920167782
      %v1315 = vsel %vm1307, %v1298, %v1314
      %v1316 = vsel %vm1306, %v1313, %v1315
      %v1317 = vsel %vm1305, %v1295, %v1298
      %v1318 = vsel %vm1308, %v1304, 1326507024
      %v1319 = vsel %vm1307, %v1301, %v1318
      %v1320 = vsel %vm1306, %v1317, %v1319
      %v1321 = vshll.u32 %v1281, 8
      %v1322 = vand.u32 %v1321, 65535
      %v1323 = vshrl.u32 %v1321, 16
      %v1324 = vand.u32 %v1320, 65535
      %v1325 = vshrl.u32 %v1320, 16
      %v1326 = vmul.u32 %v1322, %v1324
      %v1327 = vmul.u32 %v1322, %v1325
      %v1328 = vmul.u32 %v1323, %v1324
      %v1329 = vmul.u32 %v1323, %v1325
      %v1330 = vshll.u32 %v1327, 16
      %v1331 = vshrl.u32 %v1327, 16
      %v1332 = vshll.u32 %v1328, 16
      %v1333 = vshrl.u32 %v1328, 16
      %vm1334 = vc.u32 %v1326, %v1330
      %v1335 = vsel %vm1334, 1, 0
      %v1336 = vadd.s32 %v1326, %v1330
      %v1337 = vadd.s32 %v1329, %v1335
      %vm1338 = vc.u32 %v1336, %v1332
      %v1339 = vsel %vm1338, 1, 0
      %v1340 = vadd.s32 %v1336, %v1332
      %v1341 = vadd.s32 %v1337, %v1339
      %v1342 = vadd.s32 %v1341, %v1331
      %v1343 = vadd.s32 %v1342, %v1333
      %v1344 = vand.u32 %v1321, 65535
      %v1345 = vshrl.u32 %v1321, 16
      %v1346 = vand.u32 %v1316, 65535
      %v1347 = vshrl.u32 %v1316, 16
      %v1348 = vmul.u32 %v1344, %v1346
      %v1349 = vmul.u32 %v1344, %v1347
      %v1350 = vmul.u32 %v1345, %v1346
      %v1351 = vmul.u32 %v1345, %v1347
      %v1352 = vshll.u32 %v1349, 16
      %v1353 = vshrl.u32 %v1349, 16
      %v1354 = vshll.u32 %v1350, 16
      %v1355 = vshrl.u32 %v1350, 16
      %vm1356 = vc.u32 %v1348, %v1352
      %v1357 = vsel %vm1356, 1, 0
      %v1358 = vadd.s32 %v1348, %v1352
      %v1359 = vadd.s32 %v1351, %v1357
      %vm1360 = vc.u32 %v1358, %v1354
      %v1361 = vsel %vm1360, 1, 0
      %v1362 = vadd.s32 %v1358, %v1354
      %v1363 = vadd.s32 %v1359, %v1361
      %v1364 = vadd.s32 %v1363, %v1353
      %v1365 = vadd.s32 %v1364, %v1355
      %v1366 = vmul.u32 %v1321, %v1312
      %v1367 = vadd.s32 %v1343, %v1362
      %vm1368 = vc.u32 %v1343, %v1362
      %v1369 = vadd.s32 %v1365, 1
      %v1370 = vsel %vm1368, %v1369, %v1365
      %v1371 = vadd.s32 %v1366, %v1370
      %v1372 = vadd.s32 %v1371, 536870912
      %v1373 = vshrl.u32 %v1372, 30
      %v1374 = vshll.u32 %v1373, 30
      %v1375 = vsub.s32 %v1371, %v1374
      %vm1376 = vcmp.lt.s32.totalorder %v1375, 0
      %v1377 = vsub.s32 0, %v1375
      %v1378 = vsel %vm1376, %v1377, %v1375
      %v1379 = vclz %v1378
      %v1380 = vsub.s32 %v1379, 2
      %vm1381 = vcmp.gt.s32.totalorder 0, %v1380
      %v1382 = vsel %vm1381, 0, %v1380
      %v1383 = vsub.s32 32, %v1382
      %v1384 = vshll.u32 %v1375, %v1382
      %v1385 = vshrl.u32 %v1367, %v1383
      %v1386 = vor.u32 %v1384, %v1385
      %v1387 = vsub.s32 4294967266, %v1382
      %v1388 = vadd.s32 %v1387, 127
      %v1389 = vshll.u32 %v1388, 23
      %v1390 = vor.u32 4788187, %v1389
      %v1391 = vand.u32 2147483647, %v1390
      %v1393 = vcvt.s32.f32 %v1386
      %v1394 = vmul.f32 %v1393, %v1391
      %v1395 = vxor.u32 %v1394, 2147483648
      %v1396 = vsel %vm1275, %v1395, %v1394
      %v1397 = vsub.s32 4, %v1373
      %v1398 = vsel %vm1275, %v1397, %v1373
      %v1399 = vsel %vm1274, %v807, %v1396
      %v1400 = vsel %vm1274, 0, %v1398
      %v1401 = vmul.f32 %v1399, %v1399
      %v1402 = vmul.f32 %v1401, -0.001358992
      %v1403 = vadd.f32 %v1402, 0.041655596
      %v1404 = vmul.f32 %v1401, %v1403
      %v1405 = vadd.f32 %v1404, -0.4999988
      %v1406 = vmul.f32 %v1401, %v1405
      %v1407 = vadd.f32 1.0, %v1406
      %v1408 = vmul.f32 %v1399, %v1399
      %v1409 = vmul.f32 %v1408, -0.00019511016
      %v1410 = vadd.f32 %v1409, 0.008332121
      %v1411 = vmul.f32 %v1408, %v1410
      %v1412 = vadd.f32 %v1411, -0.16666654
      %v1413 = vmul.f32 %v1408, %v1412
      %v1414 = vadd.f32 %v1413, 1.0
      %v1415 = vmul.f32 %v1414, %v1399
      %vm1416 = vweird.f32 %v807
      %v1417 = vadd.s32 %v1400, 3
      %v1418 = vand.u32 %v1417, 3
      %vm1419 = vcmp.lt.s32.totalorder %v1418, 2
      %vm1420 = vcmp.eq.s32.totalorder %v1418, 0
      %v1421 = vxor.u32 %v1415, 2147483648
      %v1422 = vsel %vm1420, %v1407, %v1421
      %vm1423 = vcmp.eq.s32.totalorder %v1418, 2
      %v1424 = vxor.u32 %v1407, 2147483648
      %v1425 = vsel %vm1423, %v1424, %v1415
      %v1426 = vsel %vm1419, %v1422, %v1425
      %v1427 = vsel %vm1416, nan, %v1426
      %v1428 = vld [vmem:[%s5] sm:$0xff]
      %v1429 = vld [vmem:[%s5 + $0x8] sm:$0xff]
      %v1430 = vld [vmem:[%s5 + $0x10] sm:$0xff]
      %v1431 = vld [vmem:[%s5 + $0x18] sm:$0xff]
      %v1432 = vld [vmem:[%s6] sm:$0xff]
      %v1433 = vld [vmem:[%s6 + $0x8] sm:$0xff]
      %v1434 = vld [vmem:[%s6 + $0x10] sm:$0xff]
      %v1435 = vld [vmem:[%s6 + $0x18] sm:$0xff]
      %1437 = vset.pattern.permute.xlu0 0
      %1438 = vperm.xlu0 %1437, %v1432
      %v1439 = vpop.permute.xlu0 %1438
      %1442 = vset.pattern.permute.xlu0 0
      %1443 = vperm.xlu0 %1442, %v1433
      %v1444 = vpop.permute.xlu0 %1443
      %1447 = vset.pattern.permute.xlu0 0
      %1448 = vperm.xlu0 %1447, %v1434
      %v1449 = vpop.permute.xlu0 %1448
      %1452 = vset.pattern.permute.xlu0 0
      %1453 = vperm.xlu0 %1452, %v1435
      %v1454 = vpop.permute.xlu0 %1453
      %v1457 = vsel %vm778, %v1428, 0
      %v1460 = vsel %vm778, %v1429, 0
      %v1463 = vsel %vm778, %v1430, 0
      %v1466 = vsel %vm778, %v1431, 0
      %1468 = vmatpush.msra.mxu0 0.0
      %1469 = vmatpush.msra.mxu0 0.0
      %1470 = vmatpush.msra.mxu0 0.0
      %1471 = vmatpush.msra.mxu0 0.0
      %1472 = vmatpush.msra.mxu0 0.0
      %1473 = vmatpush.msra.mxu0 0.0
      %1474 = vmatpush.msra.mxu0 0.0
      %1475 = vmatpush.msra.mxu0 0.0
      %1476 = vmatpush.msra.mxu0 0.0
      %1477 = vmatpush.msra.mxu0 0.0
      %1478 = vmatpush.msra.mxu0 0.0
      %1479 = vmatpush.msra.mxu0 0.0
      %1480 = vmatpush.msra.mxu0 %v1427
      %1481 = vmatpush.msra.mxu0 %v1272
      %1482 = vmatpush.msra.mxu0 %v1117
      %1483 = vmatpush.msra.mxu0 %v962
      %1484 = vmatmul.f32.gmra.mxu0 %v1457
      %v1485 = vpop.f32.mrf.mxu0
      %v1486 = vadd.f32 %v1439, %v1485
      %1487 = vmatmul.f32.gmra.mxu0 %v1460
      %v1488 = vpop.f32.mrf.mxu0
      %v1489 = vadd.f32 %v1444, %v1488
      %1490 = vmatmul.f32.gmra.mxu0 %v1463
      %v1491 = vpop.f32.mrf.mxu0
      %v1492 = vadd.f32 %v1449, %v1491
      %1493 = vmatmul.f32.gmra.mxu0 %v1466
      %v1494 = vpop.f32.mrf.mxu0
      %v1495 = vadd.f32 %v1454, %v1494
      %1496 = vdwg.mxu0
      %v1497 = vand.u32 2147483647, %v1486
      %vm1498 = vcmp.le.f32.partialorder %v1497, 0.7853982
      %vm1499 = vcmp.lt.s32.totalorder %v1486, 0
      %v1500 = vand.u32 %v1486, 2139095040
      %v1501 = vshrl.u32 %v1500, 23
      %v1502 = vsub.s32 %v1501, 127
      %v1503 = vand.u32 2147483647, %v1486
      %v1504 = vand.u32 %v1503, 8388607
      %v1505 = vor.u32 %v1504, 8388608
      %v1506 = vsub.s32 0, %v1505
      %v1507 = vadd.s32 %v1502, 1
      %vm1508 = vcmp.gt.s32.totalorder %v1507, 0
      %v1509 = vsel %vm1508, %v1507, 0
      %v1510 = vshrl.u32 %v1509, 5
      %v1511 = vand.u32 %v1509, 31
      %v1512 = vsub.s32 32, %v1511
      %v1513 = vshrl.u32 683565275, %v1512
      %v1514 = vshll.u32 683565275, %v1511
      %v1515 = vshrl.u32 2475754826, %v1512
      %v1516 = vor.u32 %v1514, %v1515
      %v1517 = vshll.u32 2475754826, %v1511
      %v1518 = vshrl.u32 2131351028, %v1512
      %v1519 = vor.u32 %v1517, %v1518
      %v1520 = vshll.u32 2131351028, %v1511
      %v1521 = vshrl.u32 2102212464, %v1512
      %v1522 = vor.u32 %v1520, %v1521
      %v1523 = vshll.u32 2102212464, %v1511
      %v1524 = vshrl.u32 920167782, %v1512
      %v1525 = vor.u32 %v1523, %v1524
      %v1526 = vshll.u32 920167782, %v1511
      %v1527 = vshrl.u32 1326507024, %v1512
      %v1528 = vor.u32 %v1526, %v1527
      %vm1529 = vcmp.lt.s32.totalorder %v1510, 1
      %vm1530 = vcmp.lt.s32.totalorder %v1510, 2
      %vm1531 = vcmp.lt.s32.totalorder %v1510, 3
      %vm1532 = vcmp.lt.s32.totalorder %v1510, 4
      %v1533 = vsel %vm1529, %v1513, %v1516
      %v1534 = vsel %vm1532, %v1522, 2102212464
      %v1535 = vsel %vm1531, %v1519, %v1534
      %v1536 = vsel %vm1530, %v1533, %v1535
      %v1537 = vsel %vm1529, %v1516, %v1519
      %v1538 = vsel %vm1532, %v1525, 920167782
      %v1539 = vsel %vm1531, %v1522, %v1538
      %v1540 = vsel %vm1530, %v1537, %v1539
      %v1541 = vsel %vm1529, %v1519, %v1522
      %v1542 = vsel %vm1532, %v1528, 1326507024
      %v1543 = vsel %vm1531, %v1525, %v1542
      %v1544 = vsel %vm1530, %v1541, %v1543
      %v1545 = vshll.u32 %v1505, 8
      %v1546 = vand.u32 %v1545, 65535
      %v1547 = vshrl.u32 %v1545, 16
      %v1548 = vand.u32 %v1544, 65535
      %v1549 = vshrl.u32 %v1544, 16
      %v1550 = vmul.u32 %v1546, %v1548
      %v1551 = vmul.u32 %v1546, %v1549
      %v1552 = vmul.u32 %v1547, %v1548
      %v1553 = vmul.u32 %v1547, %v1549
      %v1554 = vshll.u32 %v1551, 16
      %v1555 = vshrl.u32 %v1551, 16
      %v1556 = vshll.u32 %v1552, 16
      %v1557 = vshrl.u32 %v1552, 16
      %vm1558 = vc.u32 %v1550, %v1554
      %v1559 = vsel %vm1558, 1, 0
      %v1560 = vadd.s32 %v1550, %v1554
      %v1561 = vadd.s32 %v1553, %v1559
      %vm1562 = vc.u32 %v1560, %v1556
      %v1563 = vsel %vm1562, 1, 0
      %v1564 = vadd.s32 %v1560, %v1556
      %v1565 = vadd.s32 %v1561, %v1563
      %v1566 = vadd.s32 %v1565, %v1555
      %v1567 = vadd.s32 %v1566, %v1557
      %v1568 = vand.u32 %v1545, 65535
      %v1569 = vshrl.u32 %v1545, 16
      %v1570 = vand.u32 %v1540, 65535
      %v1571 = vshrl.u32 %v1540, 16
      %v1572 = vmul.u32 %v1568, %v1570
      %v1573 = vmul.u32 %v1568, %v1571
      %v1574 = vmul.u32 %v1569, %v1570
      %v1575 = vmul.u32 %v1569, %v1571
      %v1576 = vshll.u32 %v1573, 16
      %v1577 = vshrl.u32 %v1573, 16
      %v1578 = vshll.u32 %v1574, 16
      %v1579 = vshrl.u32 %v1574, 16
      %vm1580 = vc.u32 %v1572, %v1576
      %v1581 = vsel %vm1580, 1, 0
      %v1582 = vadd.s32 %v1572, %v1576
      %v1583 = vadd.s32 %v1575, %v1581
      %vm1584 = vc.u32 %v1582, %v1578
      %v1585 = vsel %vm1584, 1, 0
      %v1586 = vadd.s32 %v1582, %v1578
      %v1587 = vadd.s32 %v1583, %v1585
      %v1588 = vadd.s32 %v1587, %v1577
      %v1589 = vadd.s32 %v1588, %v1579
      %v1590 = vmul.u32 %v1545, %v1536
      %v1591 = vadd.s32 %v1567, %v1586
      %vm1592 = vc.u32 %v1567, %v1586
      %v1593 = vadd.s32 %v1589, 1
      %v1594 = vsel %vm1592, %v1593, %v1589
      %v1595 = vadd.s32 %v1590, %v1594
      %v1596 = vadd.s32 %v1595, 536870912
      %v1597 = vshrl.u32 %v1596, 30
      %v1598 = vshll.u32 %v1597, 30
      %v1599 = vsub.s32 %v1595, %v1598
      %vm1600 = vcmp.lt.s32.totalorder %v1599, 0
      %v1601 = vsub.s32 0, %v1599
      %v1602 = vsel %vm1600, %v1601, %v1599
      %v1603 = vclz %v1602
      %v1604 = vsub.s32 %v1603, 2
      %vm1605 = vcmp.gt.s32.totalorder 0, %v1604
      %v1606 = vsel %vm1605, 0, %v1604
      %v1607 = vsub.s32 32, %v1606
      %v1608 = vshll.u32 %v1599, %v1606
      %v1609 = vshrl.u32 %v1591, %v1607
      %v1610 = vor.u32 %v1608, %v1609
      %v1611 = vsub.s32 4294967266, %v1606
      %v1612 = vadd.s32 %v1611, 127
      %v1613 = vshll.u32 %v1612, 23
      %v1614 = vor.u32 4788187, %v1613
      %v1615 = vand.u32 2147483647, %v1614
      %v1617 = vcvt.s32.f32 %v1610
      %v1618 = vmul.f32 %v1617, %v1615
      %v1619 = vxor.u32 %v1618, 2147483648
      %v1620 = vsel %vm1499, %v1619, %v1618
      %v1621 = vsub.s32 4, %v1597
      %v1622 = vsel %vm1499, %v1621, %v1597
      %v1623 = vsel %vm1498, %v1486, %v1620
      %v1624 = vsel %vm1498, 0, %v1622
      %v1625 = vmul.f32 %v1623, %v1623
      %v1626 = vmul.f32 %v1625, -0.001358992
      %v1627 = vadd.f32 %v1626, 0.041655596
      %v1628 = vmul.f32 %v1625, %v1627
      %v1629 = vadd.f32 %v1628, -0.4999988
      %v1630 = vmul.f32 %v1625, %v1629
      %v1631 = vadd.f32 1.0, %v1630
      %v1632 = vmul.f32 %v1623, %v1623
      %v1633 = vmul.f32 %v1632, -0.00019511016
      %v1634 = vadd.f32 %v1633, 0.008332121
      %v1635 = vmul.f32 %v1632, %v1634
      %v1636 = vadd.f32 %v1635, -0.16666654
      %v1637 = vmul.f32 %v1632, %v1636
      %v1638 = vadd.f32 %v1637, 1.0
      %v1639 = vmul.f32 %v1638, %v1623
      %vm1640 = vweird.f32 %v1486
      %v1641 = vadd.s32 %v1624, 3
      %v1642 = vand.u32 %v1641, 3
      %vm1643 = vcmp.lt.s32.totalorder %v1642, 2
      %vm1644 = vcmp.eq.s32.totalorder %v1642, 0
      %v1645 = vxor.u32 %v1639, 2147483648
      %v1646 = vsel %vm1644, %v1631, %v1645
      %vm1647 = vcmp.eq.s32.totalorder %v1642, 2
      %v1648 = vxor.u32 %v1631, 2147483648
      %v1649 = vsel %vm1647, %v1648, %v1639
      %v1650 = vsel %vm1643, %v1646, %v1649
      %v1651 = vsel %vm1640, nan, %v1650
      %v1652 = vand.u32 2147483647, %v1489
      %vm1653 = vcmp.le.f32.partialorder %v1652, 0.7853982
      %vm1654 = vcmp.lt.s32.totalorder %v1489, 0
      %v1655 = vand.u32 %v1489, 2139095040
      %v1656 = vshrl.u32 %v1655, 23
      %v1657 = vsub.s32 %v1656, 127
      %v1658 = vand.u32 2147483647, %v1489
      %v1659 = vand.u32 %v1658, 8388607
      %v1660 = vor.u32 %v1659, 8388608
      %v1661 = vsub.s32 0, %v1660
      %v1662 = vadd.s32 %v1657, 1
      %vm1663 = vcmp.gt.s32.totalorder %v1662, 0
      %v1664 = vsel %vm1663, %v1662, 0
      %v1665 = vshrl.u32 %v1664, 5
      %v1666 = vand.u32 %v1664, 31
      %v1667 = vsub.s32 32, %v1666
      %v1668 = vshrl.u32 683565275, %v1667
      %v1669 = vshll.u32 683565275, %v1666
      %v1670 = vshrl.u32 2475754826, %v1667
      %v1671 = vor.u32 %v1669, %v1670
      %v1672 = vshll.u32 2475754826, %v1666
      %v1673 = vshrl.u32 2131351028, %v1667
      %v1674 = vor.u32 %v1672, %v1673
      %v1675 = vshll.u32 2131351028, %v1666
      %v1676 = vshrl.u32 2102212464, %v1667
      %v1677 = vor.u32 %v1675, %v1676
      %v1678 = vshll.u32 2102212464, %v1666
      %v1679 = vshrl.u32 920167782, %v1667
      %v1680 = vor.u32 %v1678, %v1679
      %v1681 = vshll.u32 920167782, %v1666
      %v1682 = vshrl.u32 1326507024, %v1667
      %v1683 = vor.u32 %v1681, %v1682
      %vm1684 = vcmp.lt.s32.totalorder %v1665, 1
      %vm1685 = vcmp.lt.s32.totalorder %v1665, 2
      %vm1686 = vcmp.lt.s32.totalorder %v1665, 3
      %vm1687 = vcmp.lt.s32.totalorder %v1665, 4
      %v1688 = vsel %vm1684, %v1668, %v1671
      %v1689 = vsel %vm1687, %v1677, 2102212464
      %v1690 = vsel %vm1686, %v1674, %v1689
      %v1691 = vsel %vm1685, %v1688, %v1690
      %v1692 = vsel %vm1684, %v1671, %v1674
      %v1693 = vsel %vm1687, %v1680, 920167782
      %v1694 = vsel %vm1686, %v1677, %v1693
      %v1695 = vsel %vm1685, %v1692, %v1694
      %v1696 = vsel %vm1684, %v1674, %v1677
      %v1697 = vsel %vm1687, %v1683, 1326507024
      %v1698 = vsel %vm1686, %v1680, %v1697
      %v1699 = vsel %vm1685, %v1696, %v1698
      %v1700 = vshll.u32 %v1660, 8
      %v1701 = vand.u32 %v1700, 65535
      %v1702 = vshrl.u32 %v1700, 16
      %v1703 = vand.u32 %v1699, 65535
      %v1704 = vshrl.u32 %v1699, 16
      %v1705 = vmul.u32 %v1701, %v1703
      %v1706 = vmul.u32 %v1701, %v1704
      %v1707 = vmul.u32 %v1702, %v1703
      %v1708 = vmul.u32 %v1702, %v1704
      %v1709 = vshll.u32 %v1706, 16
      %v1710 = vshrl.u32 %v1706, 16
      %v1711 = vshll.u32 %v1707, 16
      %v1712 = vshrl.u32 %v1707, 16
      %vm1713 = vc.u32 %v1705, %v1709
      %v1714 = vsel %vm1713, 1, 0
      %v1715 = vadd.s32 %v1705, %v1709
      %v1716 = vadd.s32 %v1708, %v1714
      %vm1717 = vc.u32 %v1715, %v1711
      %v1718 = vsel %vm1717, 1, 0
      %v1719 = vadd.s32 %v1715, %v1711
      %v1720 = vadd.s32 %v1716, %v1718
      %v1721 = vadd.s32 %v1720, %v1710
      %v1722 = vadd.s32 %v1721, %v1712
      %v1723 = vand.u32 %v1700, 65535
      %v1724 = vshrl.u32 %v1700, 16
      %v1725 = vand.u32 %v1695, 65535
      %v1726 = vshrl.u32 %v1695, 16
      %v1727 = vmul.u32 %v1723, %v1725
      %v1728 = vmul.u32 %v1723, %v1726
      %v1729 = vmul.u32 %v1724, %v1725
      %v1730 = vmul.u32 %v1724, %v1726
      %v1731 = vshll.u32 %v1728, 16
      %v1732 = vshrl.u32 %v1728, 16
      %v1733 = vshll.u32 %v1729, 16
      %v1734 = vshrl.u32 %v1729, 16
      %vm1735 = vc.u32 %v1727, %v1731
      %v1736 = vsel %vm1735, 1, 0
      %v1737 = vadd.s32 %v1727, %v1731
      %v1738 = vadd.s32 %v1730, %v1736
      %vm1739 = vc.u32 %v1737, %v1733
      %v1740 = vsel %vm1739, 1, 0
      %v1741 = vadd.s32 %v1737, %v1733
      %v1742 = vadd.s32 %v1738, %v1740
      %v1743 = vadd.s32 %v1742, %v1732
      %v1744 = vadd.s32 %v1743, %v1734
      %v1745 = vmul.u32 %v1700, %v1691
      %v1746 = vadd.s32 %v1722, %v1741
      %vm1747 = vc.u32 %v1722, %v1741
      %v1748 = vadd.s32 %v1744, 1
      %v1749 = vsel %vm1747, %v1748, %v1744
      %v1750 = vadd.s32 %v1745, %v1749
      %v1751 = vadd.s32 %v1750, 536870912
      %v1752 = vshrl.u32 %v1751, 30
      %v1753 = vshll.u32 %v1752, 30
      %v1754 = vsub.s32 %v1750, %v1753
      %vm1755 = vcmp.lt.s32.totalorder %v1754, 0
      %v1756 = vsub.s32 0, %v1754
      %v1757 = vsel %vm1755, %v1756, %v1754
      %v1758 = vclz %v1757
      %v1759 = vsub.s32 %v1758, 2
      %vm1760 = vcmp.gt.s32.totalorder 0, %v1759
      %v1761 = vsel %vm1760, 0, %v1759
      %v1762 = vsub.s32 32, %v1761
      %v1763 = vshll.u32 %v1754, %v1761
      %v1764 = vshrl.u32 %v1746, %v1762
      %v1765 = vor.u32 %v1763, %v1764
      %v1766 = vsub.s32 4294967266, %v1761
      %v1767 = vadd.s32 %v1766, 127
      %v1768 = vshll.u32 %v1767, 23
      %v1769 = vor.u32 4788187, %v1768
      %v1770 = vand.u32 2147483647, %v1769
      %v1772 = vcvt.s32.f32 %v1765
      %v1773 = vmul.f32 %v1772, %v1770
      %v1774 = vxor.u32 %v1773, 2147483648
      %v1775 = vsel %vm1654, %v1774, %v1773
      %v1776 = vsub.s32 4, %v1752
      %v1777 = vsel %vm1654, %v1776, %v1752
      %v1778 = vsel %vm1653, %v1489, %v1775
      %v1779 = vsel %vm1653, 0, %v1777
      %v1780 = vmul.f32 %v1778, %v1778
      %v1781 = vmul.f32 %v1780, -0.001358992
      %v1782 = vadd.f32 %v1781, 0.041655596
      %v1783 = vmul.f32 %v1780, %v1782
      %v1784 = vadd.f32 %v1783, -0.4999988
      %v1785 = vmul.f32 %v1780, %v1784
      %v1786 = vadd.f32 1.0, %v1785
      %v1787 = vmul.f32 %v1778, %v1778
      %v1788 = vmul.f32 %v1787, -0.00019511016
      %v1789 = vadd.f32 %v1788, 0.008332121
      %v1790 = vmul.f32 %v1787, %v1789
      %v1791 = vadd.f32 %v1790, -0.16666654
      %v1792 = vmul.f32 %v1787, %v1791
      %v1793 = vadd.f32 %v1792, 1.0
      %v1794 = vmul.f32 %v1793, %v1778
      %vm1795 = vweird.f32 %v1489
      %v1796 = vadd.s32 %v1779, 3
      %v1797 = vand.u32 %v1796, 3
      %vm1798 = vcmp.lt.s32.totalorder %v1797, 2
      %vm1799 = vcmp.eq.s32.totalorder %v1797, 0
      %v1800 = vxor.u32 %v1794, 2147483648
      %v1801 = vsel %vm1799, %v1786, %v1800
      %vm1802 = vcmp.eq.s32.totalorder %v1797, 2
      %v1803 = vxor.u32 %v1786, 2147483648
      %v1804 = vsel %vm1802, %v1803, %v1794
      %v1805 = vsel %vm1798, %v1801, %v1804
      %v1806 = vsel %vm1795, nan, %v1805
      %v1807 = vand.u32 2147483647, %v1492
      %vm1808 = vcmp.le.f32.partialorder %v1807, 0.7853982
      %vm1809 = vcmp.lt.s32.totalorder %v1492, 0
      %v1810 = vand.u32 %v1492, 2139095040
      %v1811 = vshrl.u32 %v1810, 23
      %v1812 = vsub.s32 %v1811, 127
      %v1813 = vand.u32 2147483647, %v1492
      %v1814 = vand.u32 %v1813, 8388607
      %v1815 = vor.u32 %v1814, 8388608
      %v1816 = vsub.s32 0, %v1815
      %v1817 = vadd.s32 %v1812, 1
      %vm1818 = vcmp.gt.s32.totalorder %v1817, 0
      %v1819 = vsel %vm1818, %v1817, 0
      %v1820 = vshrl.u32 %v1819, 5
      %v1821 = vand.u32 %v1819, 31
      %v1822 = vsub.s32 32, %v1821
      %v1823 = vshrl.u32 683565275, %v1822
      %v1824 = vshll.u32 683565275, %v1821
      %v1825 = vshrl.u32 2475754826, %v1822
      %v1826 = vor.u32 %v1824, %v1825
      %v1827 = vshll.u32 2475754826, %v1821
      %v1828 = vshrl.u32 2131351028, %v1822
      %v1829 = vor.u32 %v1827, %v1828
      %v1830 = vshll.u32 2131351028, %v1821
      %v1831 = vshrl.u32 2102212464, %v1822
      %v1832 = vor.u32 %v1830, %v1831
      %v1833 = vshll.u32 2102212464, %v1821
      %v1834 = vshrl.u32 920167782, %v1822
      %v1835 = vor.u32 %v1833, %v1834
      %v1836 = vshll.u32 920167782, %v1821
      %v1837 = vshrl.u32 1326507024, %v1822
      %v1838 = vor.u32 %v1836, %v1837
      %vm1839 = vcmp.lt.s32.totalorder %v1820, 1
      %vm1840 = vcmp.lt.s32.totalorder %v1820, 2
      %vm1841 = vcmp.lt.s32.totalorder %v1820, 3
      %vm1842 = vcmp.lt.s32.totalorder %v1820, 4
      %v1843 = vsel %vm1839, %v1823, %v1826
      %v1844 = vsel %vm1842, %v1832, 2102212464
      %v1845 = vsel %vm1841, %v1829, %v1844
      %v1846 = vsel %vm1840, %v1843, %v1845
      %v1847 = vsel %vm1839, %v1826, %v1829
      %v1848 = vsel %vm1842, %v1835, 920167782
      %v1849 = vsel %vm1841, %v1832, %v1848
      %v1850 = vsel %vm1840, %v1847, %v1849
      %v1851 = vsel %vm1839, %v1829, %v1832
      %v1852 = vsel %vm1842, %v1838, 1326507024
      %v1853 = vsel %vm1841, %v1835, %v1852
      %v1854 = vsel %vm1840, %v1851, %v1853
      %v1855 = vshll.u32 %v1815, 8
      %v1856 = vand.u32 %v1855, 65535
      %v1857 = vshrl.u32 %v1855, 16
      %v1858 = vand.u32 %v1854, 65535
      %v1859 = vshrl.u32 %v1854, 16
      %v1860 = vmul.u32 %v1856, %v1858
      %v1861 = vmul.u32 %v1856, %v1859
      %v1862 = vmul.u32 %v1857, %v1858
      %v1863 = vmul.u32 %v1857, %v1859
      %v1864 = vshll.u32 %v1861, 16
      %v1865 = vshrl.u32 %v1861, 16
      %v1866 = vshll.u32 %v1862, 16
      %v1867 = vshrl.u32 %v1862, 16
      %vm1868 = vc.u32 %v1860, %v1864
      %v1869 = vsel %vm1868, 1, 0
      %v1870 = vadd.s32 %v1860, %v1864
      %v1871 = vadd.s32 %v1863, %v1869
      %vm1872 = vc.u32 %v1870, %v1866
      %v1873 = vsel %vm1872, 1, 0
      %v1874 = vadd.s32 %v1870, %v1866
      %v1875 = vadd.s32 %v1871, %v1873
      %v1876 = vadd.s32 %v1875, %v1865
      %v1877 = vadd.s32 %v1876, %v1867
      %v1878 = vand.u32 %v1855, 65535
      %v1879 = vshrl.u32 %v1855, 16
      %v1880 = vand.u32 %v1850, 65535
      %v1881 = vshrl.u32 %v1850, 16
      %v1882 = vmul.u32 %v1878, %v1880
      %v1883 = vmul.u32 %v1878, %v1881
      %v1884 = vmul.u32 %v1879, %v1880
      %v1885 = vmul.u32 %v1879, %v1881
      %v1886 = vshll.u32 %v1883, 16
      %v1887 = vshrl.u32 %v1883, 16
      %v1888 = vshll.u32 %v1884, 16
      %v1889 = vshrl.u32 %v1884, 16
      %vm1890 = vc.u32 %v1882, %v1886
      %v1891 = vsel %vm1890, 1, 0
      %v1892 = vadd.s32 %v1882, %v1886
      %v1893 = vadd.s32 %v1885, %v1891
      %vm1894 = vc.u32 %v1892, %v1888
      %v1895 = vsel %vm1894, 1, 0
      %v1896 = vadd.s32 %v1892, %v1888
      %v1897 = vadd.s32 %v1893, %v1895
      %v1898 = vadd.s32 %v1897, %v1887
      %v1899 = vadd.s32 %v1898, %v1889
      %v1900 = vmul.u32 %v1855, %v1846
      %v1901 = vadd.s32 %v1877, %v1896
      %vm1902 = vc.u32 %v1877, %v1896
      %v1903 = vadd.s32 %v1899, 1
      %v1904 = vsel %vm1902, %v1903, %v1899
      %v1905 = vadd.s32 %v1900, %v1904
      %v1906 = vadd.s32 %v1905, 536870912
      %v1907 = vshrl.u32 %v1906, 30
      %v1908 = vshll.u32 %v1907, 30
      %v1909 = vsub.s32 %v1905, %v1908
      %vm1910 = vcmp.lt.s32.totalorder %v1909, 0
      %v1911 = vsub.s32 0, %v1909
      %v1912 = vsel %vm1910, %v1911, %v1909
      %v1913 = vclz %v1912
      %v1914 = vsub.s32 %v1913, 2
      %vm1915 = vcmp.gt.s32.totalorder 0, %v1914
      %v1916 = vsel %vm1915, 0, %v1914
      %v1917 = vsub.s32 32, %v1916
      %v1918 = vshll.u32 %v1909, %v1916
      %v1919 = vshrl.u32 %v1901, %v1917
      %v1920 = vor.u32 %v1918, %v1919
      %v1921 = vsub.s32 4294967266, %v1916
      %v1922 = vadd.s32 %v1921, 127
      %v1923 = vshll.u32 %v1922, 23
      %v1924 = vor.u32 4788187, %v1923
      %v1925 = vand.u32 2147483647, %v1924
      %v1927 = vcvt.s32.f32 %v1920
      %v1928 = vmul.f32 %v1927, %v1925
      %v1929 = vxor.u32 %v1928, 2147483648
      %v1930 = vsel %vm1809, %v1929, %v1928
      %v1931 = vsub.s32 4, %v1907
      %v1932 = vsel %vm1809, %v1931, %v1907
      %v1933 = vsel %vm1808, %v1492, %v1930
      %v1934 = vsel %vm1808, 0, %v1932
      %v1935 = vmul.f32 %v1933, %v1933
      %v1936 = vmul.f32 %v1935, -0.001358992
      %v1937 = vadd.f32 %v1936, 0.041655596
      %v1938 = vmul.f32 %v1935, %v1937
      %v1939 = vadd.f32 %v1938, -0.4999988
      %v1940 = vmul.f32 %v1935, %v1939
      %v1941 = vadd.f32 1.0, %v1940
      %v1942 = vmul.f32 %v1933, %v1933
      %v1943 = vmul.f32 %v1942, -0.00019511016
      %v1944 = vadd.f32 %v1943, 0.008332121
      %v1945 = vmul.f32 %v1942, %v1944
      %v1946 = vadd.f32 %v1945, -0.16666654
      %v1947 = vmul.f32 %v1942, %v1946
      %v1948 = vadd.f32 %v1947, 1.0
      %v1949 = vmul.f32 %v1948, %v1933
      %vm1950 = vweird.f32 %v1492
      %v1951 = vadd.s32 %v1934, 3
      %v1952 = vand.u32 %v1951, 3
      %vm1953 = vcmp.lt.s32.totalorder %v1952, 2
      %vm1954 = vcmp.eq.s32.totalorder %v1952, 0
      %v1955 = vxor.u32 %v1949, 2147483648
      %v1956 = vsel %vm1954, %v1941, %v1955
      %vm1957 = vcmp.eq.s32.totalorder %v1952, 2
      %v1958 = vxor.u32 %v1941, 2147483648
      %v1959 = vsel %vm1957, %v1958, %v1949
      %v1960 = vsel %vm1953, %v1956, %v1959
      %v1961 = vsel %vm1950, nan, %v1960
      %v1962 = vand.u32 2147483647, %v1495
      %vm1963 = vcmp.le.f32.partialorder %v1962, 0.7853982
      %vm1964 = vcmp.lt.s32.totalorder %v1495, 0
      %v1965 = vand.u32 %v1495, 2139095040
      %v1966 = vshrl.u32 %v1965, 23
      %v1967 = vsub.s32 %v1966, 127
      %v1968 = vand.u32 2147483647, %v1495
      %v1969 = vand.u32 %v1968, 8388607
      %v1970 = vor.u32 %v1969, 8388608
      %v1971 = vsub.s32 0, %v1970
      %v1972 = vadd.s32 %v1967, 1
      %vm1973 = vcmp.gt.s32.totalorder %v1972, 0
      %v1974 = vsel %vm1973, %v1972, 0
      %v1975 = vshrl.u32 %v1974, 5
      %v1976 = vand.u32 %v1974, 31
      %v1977 = vsub.s32 32, %v1976
      %v1978 = vshrl.u32 683565275, %v1977
      %v1979 = vshll.u32 683565275, %v1976
      %v1980 = vshrl.u32 2475754826, %v1977
      %v1981 = vor.u32 %v1979, %v1980
      %v1982 = vshll.u32 2475754826, %v1976
      %v1983 = vshrl.u32 2131351028, %v1977
      %v1984 = vor.u32 %v1982, %v1983
      %v1985 = vshll.u32 2131351028, %v1976
      %v1986 = vshrl.u32 2102212464, %v1977
      %v1987 = vor.u32 %v1985, %v1986
      %v1988 = vshll.u32 2102212464, %v1976
      %v1989 = vshrl.u32 920167782, %v1977
      %v1990 = vor.u32 %v1988, %v1989
      %v1991 = vshll.u32 920167782, %v1976
      %v1992 = vshrl.u32 1326507024, %v1977
      %v1993 = vor.u32 %v1991, %v1992
      %vm1994 = vcmp.lt.s32.totalorder %v1975, 1
      %vm1995 = vcmp.lt.s32.totalorder %v1975, 2
      %vm1996 = vcmp.lt.s32.totalorder %v1975, 3
      %vm1997 = vcmp.lt.s32.totalorder %v1975, 4
      %v1998 = vsel %vm1994, %v1978, %v1981
      %v1999 = vsel %vm1997, %v1987, 2102212464
      %v2000 = vsel %vm1996, %v1984, %v1999
      %v2001 = vsel %vm1995, %v1998, %v2000
      %v2002 = vsel %vm1994, %v1981, %v1984
      %v2003 = vsel %vm1997, %v1990, 920167782
      %v2004 = vsel %vm1996, %v1987, %v2003
      %v2005 = vsel %vm1995, %v2002, %v2004
      %v2006 = vsel %vm1994, %v1984, %v1987
      %v2007 = vsel %vm1997, %v1993, 1326507024
      %v2008 = vsel %vm1996, %v1990, %v2007
      %v2009 = vsel %vm1995, %v2006, %v2008
      %v2010 = vshll.u32 %v1970, 8
      %v2011 = vand.u32 %v2010, 65535
      %v2012 = vshrl.u32 %v2010, 16
      %v2013 = vand.u32 %v2009, 65535
      %v2014 = vshrl.u32 %v2009, 16
      %v2015 = vmul.u32 %v2011, %v2013
      %v2016 = vmul.u32 %v2011, %v2014
      %v2017 = vmul.u32 %v2012, %v2013
      %v2018 = vmul.u32 %v2012, %v2014
      %v2019 = vshll.u32 %v2016, 16
      %v2020 = vshrl.u32 %v2016, 16
      %v2021 = vshll.u32 %v2017, 16
      %v2022 = vshrl.u32 %v2017, 16
      %vm2023 = vc.u32 %v2015, %v2019
      %v2024 = vsel %vm2023, 1, 0
      %v2025 = vadd.s32 %v2015, %v2019
      %v2026 = vadd.s32 %v2018, %v2024
      %vm2027 = vc.u32 %v2025, %v2021
      %v2028 = vsel %vm2027, 1, 0
      %v2029 = vadd.s32 %v2025, %v2021
      %v2030 = vadd.s32 %v2026, %v2028
      %v2031 = vadd.s32 %v2030, %v2020
      %v2032 = vadd.s32 %v2031, %v2022
      %v2033 = vand.u32 %v2010, 65535
      %v2034 = vshrl.u32 %v2010, 16
      %v2035 = vand.u32 %v2005, 65535
      %v2036 = vshrl.u32 %v2005, 16
      %v2037 = vmul.u32 %v2033, %v2035
      %v2038 = vmul.u32 %v2033, %v2036
      %v2039 = vmul.u32 %v2034, %v2035
      %v2040 = vmul.u32 %v2034, %v2036
      %v2041 = vshll.u32 %v2038, 16
      %v2042 = vshrl.u32 %v2038, 16
      %v2043 = vshll.u32 %v2039, 16
      %v2044 = vshrl.u32 %v2039, 16
      %vm2045 = vc.u32 %v2037, %v2041
      %v2046 = vsel %vm2045, 1, 0
      %v2047 = vadd.s32 %v2037, %v2041
      %v2048 = vadd.s32 %v2040, %v2046
      %vm2049 = vc.u32 %v2047, %v2043
      %v2050 = vsel %vm2049, 1, 0
      %v2051 = vadd.s32 %v2047, %v2043
      %v2052 = vadd.s32 %v2048, %v2050
      %v2053 = vadd.s32 %v2052, %v2042
      %v2054 = vadd.s32 %v2053, %v2044
      %v2055 = vmul.u32 %v2010, %v2001
      %v2056 = vadd.s32 %v2032, %v2051
      %vm2057 = vc.u32 %v2032, %v2051
      %v2058 = vadd.s32 %v2054, 1
      %v2059 = vsel %vm2057, %v2058, %v2054
      %v2060 = vadd.s32 %v2055, %v2059
      %v2061 = vadd.s32 %v2060, 536870912
      %v2062 = vshrl.u32 %v2061, 30
      %v2063 = vshll.u32 %v2062, 30
      %v2064 = vsub.s32 %v2060, %v2063
      %vm2065 = vcmp.lt.s32.totalorder %v2064, 0
      %v2066 = vsub.s32 0, %v2064
      %v2067 = vsel %vm2065, %v2066, %v2064
      %v2068 = vclz %v2067
      %v2069 = vsub.s32 %v2068, 2
      %vm2070 = vcmp.gt.s32.totalorder 0, %v2069
      %v2071 = vsel %vm2070, 0, %v2069
      %v2072 = vsub.s32 32, %v2071
      %v2073 = vshll.u32 %v2064, %v2071
      %v2074 = vshrl.u32 %v2056, %v2072
      %v2075 = vor.u32 %v2073, %v2074
      %v2076 = vsub.s32 4294967266, %v2071
      %v2077 = vadd.s32 %v2076, 127
      %v2078 = vshll.u32 %v2077, 23
      %v2079 = vor.u32 4788187, %v2078
      %v2080 = vand.u32 2147483647, %v2079
      %v2082 = vcvt.s32.f32 %v2075
      %v2083 = vmul.f32 %v2082, %v2080
      %v2084 = vxor.u32 %v2083, 2147483648
      %v2085 = vsel %vm1964, %v2084, %v2083
      %v2086 = vsub.s32 4, %v2062
      %v2087 = vsel %vm1964, %v2086, %v2062
      %v2088 = vsel %vm1963, %v1495, %v2085
      %v2089 = vsel %vm1963, 0, %v2087
      %v2090 = vmul.f32 %v2088, %v2088
      %v2091 = vmul.f32 %v2090, -0.001358992
      %v2092 = vadd.f32 %v2091, 0.041655596
      %v2093 = vmul.f32 %v2090, %v2092
      %v2094 = vadd.f32 %v2093, -0.4999988
      %v2095 = vmul.f32 %v2090, %v2094
      %v2096 = vadd.f32 1.0, %v2095
      %v2097 = vmul.f32 %v2088, %v2088
      %v2098 = vmul.f32 %v2097, -0.00019511016
      %v2099 = vadd.f32 %v2098, 0.008332121
      %v2100 = vmul.f32 %v2097, %v2099
      %v2101 = vadd.f32 %v2100, -0.16666654
      %v2102 = vmul.f32 %v2097, %v2101
      %v2103 = vadd.f32 %v2102, 1.0
      %v2104 = vmul.f32 %v2103, %v2088
      %vm2105 = vweird.f32 %v1495
      %v2106 = vadd.s32 %v2089, 3
      %v2107 = vand.u32 %v2106, 3
      %vm2108 = vcmp.lt.s32.totalorder %v2107, 2
      %vm2109 = vcmp.eq.s32.totalorder %v2107, 0
      %v2110 = vxor.u32 %v2104, 2147483648
      %v2111 = vsel %vm2109, %v2096, %v2110
      %vm2112 = vcmp.eq.s32.totalorder %v2107, 2
      %v2113 = vxor.u32 %v2096, 2147483648
      %v2114 = vsel %vm2112, %v2113, %v2104
      %v2115 = vsel %vm2108, %v2111, %v2114
      %v2116 = vsel %vm2105, nan, %v2115
      %v2117 = vld [vmem:[%s7] sm:$0x1]
      %v2118 = vld [vmem:[#allocation2] sm:$0x1]
      %2120 = vset.pattern.permute.xlu0 0
      %2121 = vperm.xlu0 %2120, %v2118
      %v2122 = vpop.permute.xlu0 %2121
      %v2124 = vperm.slane %v2122, 0
      %v2126 = vsel %vm778, %v2117, 0
      %2128 = vmatpush.msra.mxu0 0.0
      %2129 = vmatpush.msra.mxu0 0.0
      %2130 = vmatpush.msra.mxu0 0.0
      %2131 = vmatpush.msra.mxu0 0.0
      %2132 = vmatpush.msra.mxu0 0.0
      %2133 = vmatpush.msra.mxu0 0.0
      %2134 = vmatpush.msra.mxu0 0.0
      %2135 = vmatpush.msra.mxu0 0.0
      %2136 = vmatpush.msra.mxu0 0.0
      %2137 = vmatpush.msra.mxu0 0.0
      %2138 = vmatpush.msra.mxu0 0.0
      %2139 = vmatpush.msra.mxu0 0.0
      %2140 = vmatpush.msra.mxu0 %v2116
      %2141 = vmatpush.msra.mxu0 %v1961
      %2142 = vmatpush.msra.mxu0 %v1806
      %2143 = vmatpush.msra.mxu0 %v1651
      %2144 = vmatmul.f32.gmra.mxu0 %v2126
      %v2145 = vpop.f32.mrf.mxu0
      %v2146 = vadd.f32 %v2124, %v2145
      %2147 = vdwg.mxu0
      %v2149 = vrot.slane %v2146, 7
      %2150 = vrot.lane.b32.xlu0 %v2149, 112
      %v2151 = vpop.permute.xlu0 %2150
      %v2153 = vrot.slane %v2146, 6
      %2154 = vrot.lane.b32.xlu0 %v2153, 96
      %v2155 = vpop.permute.xlu0 %2154
      %v2157 = vrot.slane %v2146, 5
      %2158 = vrot.lane.b32.xlu0 %v2157, 80
      %v2159 = vpop.permute.xlu0 %2158
      %v2161 = vrot.slane %v2146, 4
      %2162 = vrot.lane.b32.xlu0 %v2161, 64
      %v2163 = vpop.permute.xlu0 %2162
      %v2165 = vrot.slane %v2146, 3
      %2166 = vrot.lane.b32.xlu0 %v2165, 48
      %v2167 = vpop.permute.xlu0 %2166
      %v2169 = vrot.slane %v2146, 2
      %2170 = vrot.lane.b32.xlu0 %v2169, 32
      %v2171 = vpop.permute.xlu0 %2170
      %v2173 = vrot.slane %v2146, 1
      %2174 = vrot.lane.b32.xlu0 %v2173, 16
      %v2175 = vpop.permute.xlu0 %2174
      %vm2177 = vcmask 1040384
      %v2178 = vsel %vm2177, %v2146, %v2151
      %vm2179 = vcmask 1041408
      %v2180 = vsel %vm2179, %v2178, %v2155
      %vm2181 = vcmask 1042432
      %v2182 = vsel %vm2181, %v2180, %v2159
      %vm2183 = vcmask 1043456
      %v2184 = vsel %vm2183, %v2182, %v2163
      %vm2185 = vcmask 1044480
      %v2186 = vsel %vm2185, %v2184, %v2167
      %vm2187 = vcmask 1045504
      %v2188 = vsel %vm2187, %v2186, %v2171
      %vm2189 = vcmask 1046528
      %v2190 = vsel %vm2189, %v2188, %v2175
      %2191 = vst.msk [vmem:[%s363] sm:$0xff] %vm773, %v2190
      %p2192 = scmp.lt.s32.totalorder %s26, 1
      %s2193 = scalar_select %p2192, %s26, 1
      %p2194 = scmp.lt.s32.totalorder %s27, 0
      %s2195 = scalar_select %p2194, %s27, 0
      %s2196 = sadd.s32 %s2195, %s2193
      %s2197 = smul.addr %s2196, 8
      %s2198 = scalar_lea.vmem %s9, %s2197
      // Predicated region
      $region57: #{sigl_forward.3} parent=55 // pred_check
        %p2199 = pneg %p253
      $region58: #{sigl_forward.3} parent=55 // pred_check_branch
        %2201 = sbr.rel (%p2199) target = $region60
      $region59: #{sigl_forward.3} parent=55 // pred_region
        _
      $region60: #{sigl_forward.3} parent=55 // pred_fallthru
        _
    $region56: #{sigl_forward.3} parent=5 // pred_fallthru
      _
    %p2202 = scmp.le.s32.totalorder 2, %s17
    // Predicated region
    $region61: #{sigl_forward.3} parent=5 // pred_check
      %p2203 = pneg %p2202
    $region62: #{sigl_forward.3} parent=5 // pred_check_branch
      %2205 = sbr.rel (%p2203) target = $region64
    $region63: #{sigl_forward.3} parent=5 // pred_region
      %s2206 = ssub.s32 %s17, 2
      // Predicated region
      $region65: #{sigl_forward.3} parent=63 // pred_check
        %p2207 = pneg %p259
      $region66: #{sigl_forward.3} parent=63 // pred_check_branch
        %2209 = sbr.rel (%p2207) target = $region68
      $region67: #{sigl_forward.3} parent=63 // pred_region
        %p2210 = scmp.lt.s32.totalorder %s28, 1
        %s2211 = scalar_select %p2210, %s28, 1
        %p2212 = scmp.lt.s32.totalorder %s29, 0
        %s2213 = scalar_select %p2212, %s29, 0
        %s2214 = sadd.s32 %s2213, %s2211
        %s2215 = smul.addr %s2214, 8
        %s2216 = scalar_lea.vmem %s9, %s2215
      $region68: #{sigl_forward.3} parent=63 // pred_fallthru
        _
    $region64: #{sigl_forward.3} parent=5 // pred_fallthru
      _
  $region6: #{sigl_forward.3} parent=0 // loop_footer
    %s21 = sadd.s32 1, %s17
  $region7: #{sigl_forward.3} parent=0 // loop_footer_branch
    %16 = sbr.rel target = $region3
  $region8: #{sigl_forward.3} parent=0 // loop_exit
    _

</llo_original>
